<compile_context>
chip_gen: v7x
topology: tpu7x:2x2x1
jax: 0.10.0
libtpu: 0.0.40
codegen_flags: <defaults>
</compile_context>

<pallas_src>
import functools

import jax
import jax.numpy as jnp
from jax.experimental import pallas as pl
from jax.experimental.pallas import tpu as pltpu


def _round_up(x, m):
    return ((x + m - 1) // m) * m


def _make_kernel(taps, tm):
    """taps: list of (phase_index, static_lane_offset, tap_index)."""

    def kernel(x_ref, xh_ref, w_ref, a_ref, c_ref, out_ref):
        # x_ref : (S2, Cin, TM)       main tile of the phase-split flat input
        # xh_ref: (S2, Cin, EXT)      right halo of the same tile
        # w_ref : (KH*KW, Cout, Cin)  raw (un-normalized) weight taps (resident)
        # a_ref : (Cout, 1) f32       folded scale  gamma * g / ||v||
        # c_ref : (Cout, 1) f32       folded shift  gamma * b + beta
        # out_ref: (Cout, TM)
        win = jnp.concatenate([x_ref[...], xh_ref[...]], axis=-1)  # (S2,Cin,TM+EXT)
        acc = jnp.zeros(out_ref.shape, jnp.float32)
        for phase, off, t in taps:                 # static Python loop (KH*KW taps)
            patch = win[phase, :, off:off + tm]    # static unit-stride slice (Cin,TM)
            acc = acc + jnp.dot(w_ref[t], patch,
                                preferred_element_type=jnp.float32)
        out_ref[...] = (a_ref[...] * acc + c_ref[...]).astype(out_ref.dtype)

    return kernel


@functools.partial(jax.jit, static_argnames=("stride", "padding"))
def norm_conv2d_forward(x, params, *, stride=1, padding=0):
    """Pallas NormConv2d.forward.  x: (N, Cin, H, W) NCHW -> (N, Cout, Ho, Wo)."""
    s, p = int(stride), int(padding)

    # ---- parameters; weight-norm scale + affine fold done ONCE, in f32 ----
    v = params["v"]
    vf = v.astype(jnp.float32)
    g = params["g"].reshape(-1).astype(jnp.float32)
    b = params["b"].reshape(-1).astype(jnp.float32)
    gamma = params["gamma"].reshape(-1).astype(jnp.float32)
    beta = params["beta"].reshape(-1).astype(jnp.float32)

    N, Cin, H, W = x.shape
    Cout, _, KH, KW = v.shape
    Ho = (H + 2 * p - KH) // s + 1
    Wo = (W + 2 * p - KW) // s + 1

    norm = jnp.sqrt(jnp.sum(vf * vf, axis=(1, 2, 3)))          # (Cout,) f32
    a = (gamma * g / norm).reshape(Cout, 1)                    # f32 folded scale
    c = (gamma * b + beta).reshape(Cout, 1)                    # f32 folded shift

    # ---- pad + stride phase split (layout prep only, no KH*KW inflation) ----
    Hp, Wp = H + 2 * p, W + 2 * p
    Hp2, Wp2 = _round_up(Hp, s), _round_up(Wp, s)
    Hq, Wq = Hp2 // s, Wp2 // s
    S2 = s * s
    xp = jnp.pad(x, ((0, 0), (0, 0), (p, p + Hp2 - Hp), (p, p + Wp2 - Wp)))
    # (N,Cin,Hq,s,Wq,s) -> (ry,rx,Cin,N,Hq,Wq) -> (S2, Cin, N*Hq*Wq)
    xph = xp.reshape(N, Cin, Hq, s, Wq, s).transpose(3, 5, 1, 0, 2, 4)
    xph = xph.reshape(S2, Cin, N * Hq * Wq)

    # Tap table: output flat position j reads phase[(dy%s,dx%s)][:, j + off(dy,dx)].
    T = KH * KW
    taps = []
    for dy in range(KH):
        for dx in range(KW):
            taps.append(((dy % s) * s + (dx % s),
                         (dy // s) * Wq + (dx // s),
                         dy * KW + dx))
    max_off = max(off for _, off, _ in taps)

    # ---- pixel-tile size under a per-generation VMEM budget ----
    M = N * Hq * Wq
    itemsize = jnp.dtype(x.dtype).itemsize
    ext = _round_up(max(max_off, 1), 128)          # right-halo width (lane aligned)
    try:
        vmem_cap = int(pltpu.get_tpu_info().vmem_capacity_bytes)
    except Exception:
        vmem_cap = 64 * 1024 * 1024                # v7x-safe fallback
    if vmem_cap < (32 << 20):
        vmem_cap = 64 * 1024 * 1024
    budget = int(vmem_cap * 0.6)
    # bytes per 128 output lanes: double-buffered in/out tiles + f32 acc + slack
    per128 = 128 * (4 * S2 * Cin * itemsize + 2 * Cout * itemsize + 4 * Cout)
    resident = T * Cout * Cin * itemsize + 2 * S2 * Cin * ext * itemsize + 8 * Cout
    cap_lanes = max(128, ((budget - resident) // per128) * 128)
    cap_lanes = min(cap_lanes, 4096)               # per-step overhead amortized by here
    n_units = pl.cdiv(_round_up(M, 128), ext)      # halo-aligned units covering M
    want_units = max(1, pl.cdiv(n_units, 2))       # prefer >=2 grid blocks (v7x: 2 TCs)
    tm_units = max(1, min(want_units, cap_lanes // ext))
    tm = tm_units * ext                            # multiple of ext (and of 128)
    M_pad = _round_up(_round_up(M, 128), tm)
    n_blocks = M_pad // tm
    L_in = M_pad + ext                             # all accessed blocks stay in bounds
    units_per_tm = tm // ext
    # TODO(synk): for very large Cin, add a Cin grid axis ("arbitrary") with an f32
    # accumulator scratch instead of loading all input channels per pixel tile.

    xph = jnp.pad(xph, ((0, 0), (0, 0), (0, L_in - M))).astype(x.dtype)
    w_taps = vf.reshape(Cout, Cin, T).transpose(2, 0, 1).astype(x.dtype)  # (T,Cout,Cin)

    need = 2 * (resident + 2 * (S2 * Cin * (tm + ext) * itemsize
                                + Cout * tm * itemsize) + Cout * tm * 4) + (4 << 20)
    vmem_limit = int(min(max(32 << 20, need), vmem_cap * 0.85))

    kernel = _make_kernel(taps, tm)
    out_flat = pl.pallas_call(
        kernel,
        out_shape=jax.ShapeDtypeStruct((Cout, M_pad), x.dtype),
        grid=(n_blocks,),
        in_specs=[
            pl.BlockSpec((S2, Cin, tm), lambda i: (0, 0, i)),              # main tile
            pl.BlockSpec((S2, Cin, ext),
                         lambda i: (0, 0, (i + 1) * units_per_tm)),        # right halo
            pl.BlockSpec((T, Cout, Cin), lambda i: (0, 0, 0)),             # weights (resident)
            pl.BlockSpec((Cout, 1), lambda i: (0, 0)),                     # a (f32, resident)
            pl.BlockSpec((Cout, 1), lambda i: (0, 0)),                     # c (f32, resident)
        ],
        out_specs=pl.BlockSpec((Cout, tm), lambda i: (0, i)),
        compiler_params=pltpu.CompilerParams(
            dimension_semantics=("parallel",),
            vmem_limit_bytes=vmem_limit,
        ),
    )(xph, xph, w_taps, a, c)

    # (Cout, N*Hq*Wq) flat (garbage columns included) -> (N, Cout, Ho, Wo) NCHW
    out = out_flat[:, :M].reshape(Cout, N, Hq, Wq)[:, :, :Ho, :Wo]
    return out.transpose(1, 0, 2, 3)


def _reference_forward(x, params, stride, padding):
    """Pure-JAX reference mirroring weight_norm(Conv2d) + gamma/beta."""
    v = params["v"]
    norm = jnp.sqrt(jnp.sum(v * v, axis=(1, 2, 3), keepdims=True))
    w = params["g"].reshape(-1, 1, 1, 1) * v / norm
    out = jax.lax.conv_general_dilated(
        x, w, window_strides=(stride, stride),
        padding=[(padding, padding), (padding, padding)],
        dimension_numbers=("NCHW", "OIHW", "NCHW"))
    out = out + params["b"].reshape(1, -1, 1, 1)
    return params["gamma"].reshape(1, -1, 1, 1) * out + params["beta"].reshape(1, -1, 1, 1)


if __name__ == "__main__":
    N, Cin, Cout, H, W, KS = 2, 4, 8, 16, 16, 3
    key = jax.random.PRNGKey(0)
    ks = jax.random.split(key, 6)

    params = {
        "v": jax.random.normal(ks[0], (Cout, Cin, KS, KS), jnp.float32) * 0.1,
        "g": jax.random.uniform(ks[1], (Cout,), jnp.float32, 0.5, 1.5),
        "b": jax.random.normal(ks[2], (Cout,), jnp.float32) * 0.1,
        "gamma": jax.random.uniform(ks[3], (Cout,), jnp.float32, 0.5, 1.5),
        "beta": jax.random.normal(ks[4], (Cout,), jnp.float32) * 0.1,
    }
    x = jax.random.normal(ks[5], (N, Cin, H, W), jnp.float32)

    # Primary config: kernel 3, stride 1, padding 1 ("same" conv).
    out = norm_conv2d_forward(x, params, stride=1, padding=1)
    jax.block_until_ready(out)
    out_ref = _reference_forward(x, params, 1, 1)
    assert out.shape == out_ref.shape == (N, Cout, H, W)
    assert jnp.allclose(out, out_ref, atol=2e-4, rtol=2e-4), float(
        jnp.max(jnp.abs(out - out_ref)))

    # Secondary config exercising stride>1 / no padding (phase-split path).
    out2 = norm_conv2d_forward(x, params, stride=2, padding=0)
    jax.block_until_ready(out2)
    out2_ref = _reference_forward(x, params, 2, 0)
    assert out2.shape == out2_ref.shape
    assert jnp.allclose(out2, out2_ref, atol=2e-4, rtol=2e-4), float(
        jnp.max(jnp.abs(out2 - out2_ref)))

    print("KERNEL_OK")
</pallas_src>

<mosaic_0001>
module attributes {stable_mosaic.version = 11 : i64} {
  func.func @kernel(%arg0: i32, %arg1: memref<1x4x384xf32, #tpu.memory_space<vmem>>, %arg2: memref<1x4x128xf32, #tpu.memory_space<vmem>>, %arg3: memref<9x8x4xf32, #tpu.memory_space<vmem>>, %arg4: memref<8x1xf32, #tpu.memory_space<vmem>>, %arg5: memref<8x1xf32, #tpu.memory_space<vmem>>, %arg6: memref<8x384xf32, #tpu.memory_space<vmem>>) attributes {dimension_semantics = [#tpu.dimension_semantics<parallel>], iteration_bounds = array<i64: 2>, scalar_prefetch = 0 : i64, scratch_operands = 0 : i64, tpu.core_type = #tpu.core_type<tc>, window_params = [{transform_indices = @transform_0, window_bounds = array<i64: 1, 4, 384>}, {transform_indices = @transform_1, window_bounds = array<i64: 1, 4, 128>}, {pipeline_mode = #tpu.pipeline_mode<synchronous>, transform_indices = @transform_2, window_bounds = array<i64: 9, 8, 4>}, {pipeline_mode = #tpu.pipeline_mode<synchronous>, transform_indices = @transform_3, window_bounds = array<i64: 8, 1>}, {pipeline_mode = #tpu.pipeline_mode<synchronous>, transform_indices = @transform_4, window_bounds = array<i64: 8, 1>}, {transform_indices = @transform_5, window_bounds = array<i64: 8, 384>}]} {
    %c0 = arith.constant 0 : index
    %c0_0 = arith.constant 0 : index
    %c0_1 = arith.constant 0 : index
    %0 = vector.load %arg1[%c0, %c0_0, %c0_1] : memref<1x4x384xf32, #tpu.memory_space<vmem>>, vector<1x4x384xf32>
    %c0_2 = arith.constant 0 : index
    %c0_3 = arith.constant 0 : index
    %c0_4 = arith.constant 0 : index
    %1 = vector.load %arg2[%c0_2, %c0_3, %c0_4] : memref<1x4x128xf32, #tpu.memory_space<vmem>>, vector<1x4x128xf32>
    %2 = tpu.concatenate %0, %1 in 2 : vector<1x4x384xf32>, vector<1x4x128xf32> -> vector<1x4x512xf32>
    %cst = arith.constant 0.000000e+00 : f32
    %3 = vector.broadcast %cst : f32 to vector<8x384xf32>
    %4 = vector.extract_strided_slice %2 {offsets = [0, 0, 0], sizes = [1, 4, 384], strides = [1, 1, 1]} : vector<1x4x512xf32> to vector<1x4x384xf32>
    %5 = vector.shape_cast %4 : vector<1x4x384xf32> to vector<4x384xf32>
    %c0_5 = arith.constant 0 : index
    %c0_6 = arith.constant 0 : index
    %c0_7 = arith.constant 0 : index
    %6 = vector.load %arg3[%c0_5, %c0_6, %c0_7] : memref<9x8x4xf32, #tpu.memory_space<vmem>>, vector<1x8x4xf32>
    %7 = vector.shape_cast %6 : vector<1x8x4xf32> to vector<8x4xf32>
    %cst_8 = arith.constant dense<0.000000e+00> : vector<8x384xf32>
    %8 = tpu.matmul %7, %5, %cst_8 {dimension_numbers = #tpu.dot_dimension_numbers<[1], [0], [0], [1], [0, 0, 1, 1], [], []>} : vector<8x4xf32>, vector<4x384xf32>, vector<8x384xf32> -> vector<8x384xf32>
    %9 = arith.addf %3, %8 : vector<8x384xf32>
    %10 = vector.extract_strided_slice %2 {offsets = [0, 0, 1], sizes = [1, 4, 384], strides = [1, 1, 1]} : vector<1x4x512xf32> to vector<1x4x384xf32>
    %11 = vector.shape_cast %10 : vector<1x4x384xf32> to vector<4x384xf32>
    %c1 = arith.constant 1 : index
    %c0_9 = arith.constant 0 : index
    %c0_10 = arith.constant 0 : index
    %12 = vector.load %arg3[%c1, %c0_9, %c0_10] : memref<9x8x4xf32, #tpu.memory_space<vmem>>, vector<1x8x4xf32>
    %13 = vector.shape_cast %12 : vector<1x8x4xf32> to vector<8x4xf32>
    %cst_11 = arith.constant dense<0.000000e+00> : vector<8x384xf32>
    %14 = tpu.matmul %13, %11, %cst_11 {dimension_numbers = #tpu.dot_dimension_numbers<[1], [0], [0], [1], [0, 0, 1, 1], [], []>} : vector<8x4xf32>, vector<4x384xf32>, vector<8x384xf32> -> vector<8x384xf32>
    %15 = arith.addf %9, %14 : vector<8x384xf32>
    %16 = vector.extract_strided_slice %2 {offsets = [0, 0, 2], sizes = [1, 4, 384], strides = [1, 1, 1]} : vector<1x4x512xf32> to vector<1x4x384xf32>
    %17 = vector.shape_cast %16 : vector<1x4x384xf32> to vector<4x384xf32>
    %c2 = arith.constant 2 : index
    %c0_12 = arith.constant 0 : index
    %c0_13 = arith.constant 0 : index
    %18 = vector.load %arg3[%c2, %c0_12, %c0_13] : memref<9x8x4xf32, #tpu.memory_space<vmem>>, vector<1x8x4xf32>
    %19 = vector.shape_cast %18 : vector<1x8x4xf32> to vector<8x4xf32>
    %cst_14 = arith.constant dense<0.000000e+00> : vector<8x384xf32>
    %20 = tpu.matmul %19, %17, %cst_14 {dimension_numbers = #tpu.dot_dimension_numbers<[1], [0], [0], [1], [0, 0, 1, 1], [], []>} : vector<8x4xf32>, vector<4x384xf32>, vector<8x384xf32> -> vector<8x384xf32>
    %21 = arith.addf %15, %20 : vector<8x384xf32>
    %22 = vector.extract_strided_slice %2 {offsets = [0, 0, 18], sizes = [1, 4, 384], strides = [1, 1, 1]} : vector<1x4x512xf32> to vector<1x4x384xf32>
    %23 = vector.shape_cast %22 : vector<1x4x384xf32> to vector<4x384xf32>
    %c3 = arith.constant 3 : index
    %c0_15 = arith.constant 0 : index
    %c0_16 = arith.constant 0 : index
    %24 = vector.load %arg3[%c3, %c0_15, %c0_16] : memref<9x8x4xf32, #tpu.memory_space<vmem>>, vector<1x8x4xf32>
    %25 = vector.shape_cast %24 : vector<1x8x4xf32> to vector<8x4xf32>
    %cst_17 = arith.constant dense<0.000000e+00> : vector<8x384xf32>
    %26 = tpu.matmul %25, %23, %cst_17 {dimension_numbers = #tpu.dot_dimension_numbers<[1], [0], [0], [1], [0, 0, 1, 1], [], []>} : vector<8x4xf32>, vector<4x384xf32>, vector<8x384xf32> -> vector<8x384xf32>
    %27 = arith.addf %21, %26 : vector<8x384xf32>
    %28 = vector.extract_strided_slice %2 {offsets = [0, 0, 19], sizes = [1, 4, 384], strides = [1, 1, 1]} : vector<1x4x512xf32> to vector<1x4x384xf32>
    %29 = vector.shape_cast %28 : vector<1x4x384xf32> to vector<4x384xf32>
    %c4 = arith.constant 4 : index
    %c0_18 = arith.constant 0 : index
    %c0_19 = arith.constant 0 : index
    %30 = vector.load %arg3[%c4, %c0_18, %c0_19] : memref<9x8x4xf32, #tpu.memory_space<vmem>>, vector<1x8x4xf32>
    %31 = vector.shape_cast %30 : vector<1x8x4xf32> to vector<8x4xf32>
    %cst_20 = arith.constant dense<0.000000e+00> : vector<8x384xf32>
    %32 = tpu.matmul %31, %29, %cst_20 {dimension_numbers = #tpu.dot_dimension_numbers<[1], [0], [0], [1], [0, 0, 1, 1], [], []>} : vector<8x4xf32>, vector<4x384xf32>, vector<8x384xf32> -> vector<8x384xf32>
    %33 = arith.addf %27, %32 : vector<8x384xf32>
    %34 = vector.extract_strided_slice %2 {offsets = [0, 0, 20], sizes = [1, 4, 384], strides = [1, 1, 1]} : vector<1x4x512xf32> to vector<1x4x384xf32>
    %35 = vector.shape_cast %34 : vector<1x4x384xf32> to vector<4x384xf32>
    %c5 = arith.constant 5 : index
    %c0_21 = arith.constant 0 : index
    %c0_22 = arith.constant 0 : index
    %36 = vector.load %arg3[%c5, %c0_21, %c0_22] : memref<9x8x4xf32, #tpu.memory_space<vmem>>, vector<1x8x4xf32>
    %37 = vector.shape_cast %36 : vector<1x8x4xf32> to vector<8x4xf32>
    %cst_23 = arith.constant dense<0.000000e+00> : vector<8x384xf32>
    %38 = tpu.matmul %37, %35, %cst_23 {dimension_numbers = #tpu.dot_dimension_numbers<[1], [0], [0], [1], [0, 0, 1, 1], [], []>} : vector<8x4xf32>, vector<4x384xf32>, vector<8x384xf32> -> vector<8x384xf32>
    %39 = arith.addf %33, %38 : vector<8x384xf32>
    %40 = vector.extract_strided_slice %2 {offsets = [0, 0, 36], sizes = [1, 4, 384], strides = [1, 1, 1]} : vector<1x4x512xf32> to vector<1x4x384xf32>
    %41 = vector.shape_cast %40 : vector<1x4x384xf32> to vector<4x384xf32>
    %c6 = arith.constant 6 : index
    %c0_24 = arith.constant 0 : index
    %c0_25 = arith.constant 0 : index
    %42 = vector.load %arg3[%c6, %c0_24, %c0_25] : memref<9x8x4xf32, #tpu.memory_space<vmem>>, vector<1x8x4xf32>
    %43 = vector.shape_cast %42 : vector<1x8x4xf32> to vector<8x4xf32>
    %cst_26 = arith.constant dense<0.000000e+00> : vector<8x384xf32>
    %44 = tpu.matmul %43, %41, %cst_26 {dimension_numbers = #tpu.dot_dimension_numbers<[1], [0], [0], [1], [0, 0, 1, 1], [], []>} : vector<8x4xf32>, vector<4x384xf32>, vector<8x384xf32> -> vector<8x384xf32>
    %45 = arith.addf %39, %44 : vector<8x384xf32>
    %46 = vector.extract_strided_slice %2 {offsets = [0, 0, 37], sizes = [1, 4, 384], strides = [1, 1, 1]} : vector<1x4x512xf32> to vector<1x4x384xf32>
    %47 = vector.shape_cast %46 : vector<1x4x384xf32> to vector<4x384xf32>
    %c7 = arith.constant 7 : index
    %c0_27 = arith.constant 0 : index
    %c0_28 = arith.constant 0 : index
    %48 = vector.load %arg3[%c7, %c0_27, %c0_28] : memref<9x8x4xf32, #tpu.memory_space<vmem>>, vector<1x8x4xf32>
    %49 = vector.shape_cast %48 : vector<1x8x4xf32> to vector<8x4xf32>
    %cst_29 = arith.constant dense<0.000000e+00> : vector<8x384xf32>
    %50 = tpu.matmul %49, %47, %cst_29 {dimension_numbers = #tpu.dot_dimension_numbers<[1], [0], [0], [1], [0, 0, 1, 1], [], []>} : vector<8x4xf32>, vector<4x384xf32>, vector<8x384xf32> -> vector<8x384xf32>
    %51 = arith.addf %45, %50 : vector<8x384xf32>
    %52 = vector.extract_strided_slice %2 {offsets = [0, 0, 38], sizes = [1, 4, 384], strides = [1, 1, 1]} : vector<1x4x512xf32> to vector<1x4x384xf32>
    %53 = vector.shape_cast %52 : vector<1x4x384xf32> to vector<4x384xf32>
    %c8 = arith.constant 8 : index
    %c0_30 = arith.constant 0 : index
    %c0_31 = arith.constant 0 : index
    %54 = vector.load %arg3[%c8, %c0_30, %c0_31] : memref<9x8x4xf32, #tpu.memory_space<vmem>>, vector<1x8x4xf32>
    %55 = vector.shape_cast %54 : vector<1x8x4xf32> to vector<8x4xf32>
    %cst_32 = arith.constant dense<0.000000e+00> : vector<8x384xf32>
    %56 = tpu.matmul %55, %53, %cst_32 {dimension_numbers = #tpu.dot_dimension_numbers<[1], [0], [0], [1], [0, 0, 1, 1], [], []>} : vector<8x4xf32>, vector<4x384xf32>, vector<8x384xf32> -> vector<8x384xf32>
    %57 = arith.addf %51, %56 : vector<8x384xf32>
    %c0_33 = arith.constant 0 : index
    %c0_34 = arith.constant 0 : index
    %58 = vector.load %arg4[%c0_33, %c0_34] : memref<8x1xf32, #tpu.memory_space<vmem>>, vector<8x1xf32>
    %59 = vector.broadcast %58 : vector<8x1xf32> to vector<8x384xf32>
    %60 = arith.mulf %59, %57 : vector<8x384xf32>
    %c0_35 = arith.constant 0 : index
    %c0_36 = arith.constant 0 : index
    %61 = vector.load %arg5[%c0_35, %c0_36] : memref<8x1xf32, #tpu.memory_space<vmem>>, vector<8x1xf32>
    %62 = vector.broadcast %61 : vector<8x1xf32> to vector<8x384xf32>
    %63 = arith.addf %60, %62 : vector<8x384xf32>
    %c0_37 = arith.constant 0 : index
    %c0_38 = arith.constant 0 : index
    %64 = vector.load %arg6[%c0_37, %c0_38] : memref<8x384xf32, #tpu.memory_space<vmem>>, vector<8x384xf32>
    tpu.vector_store %arg6[%c0_37, %c0_38], %63 {strides = array<i32>} : memref<8x384xf32, #tpu.memory_space<vmem>>, vector<8x384xf32>,
    return
  }
  func.func @transform_0(%arg0: i32) -> (i32, i32, i32) {
    %c0_i32 = arith.constant 0 : i32
    %c0_i32_0 = arith.constant 0 : i32
    %c0_i32_1 = arith.constant 0 : i32
    return %c0_i32, %c0_i32_0, %arg0 : i32, i32, i32
  }
  func.func @transform_1(%arg0: i32) -> (i32, i32, i32) {
    %c1_i32 = arith.constant 1 : i32
    %0 = arith.addi %arg0, %c1_i32 : i32
    %c3_i32 = arith.constant 3 : i32
    %1 = arith.muli %0, %c3_i32 : i32
    %c0_i32 = arith.constant 0 : i32
    %c0_i32_0 = arith.constant 0 : i32
    %c0_i32_1 = arith.constant 0 : i32
    return %c0_i32, %c0_i32_0, %1 : i32, i32, i32
  }
  func.func @transform_2(%arg0: i32) -> (i32, i32, i32) {
    %c0_i32 = arith.constant 0 : i32
    %c0_i32_0 = arith.constant 0 : i32
    %c0_i32_1 = arith.constant 0 : i32
    %c0_i32_2 = arith.constant 0 : i32
    return %c0_i32, %c0_i32_0, %c0_i32_1 : i32, i32, i32
  }
  func.func @transform_3(%arg0: i32) -> (i32, i32) {
    %c0_i32 = arith.constant 0 : i32
    %c0_i32_0 = arith.constant 0 : i32
    %c0_i32_1 = arith.constant 0 : i32
    return %c0_i32, %c0_i32_0 : i32, i32
  }
  func.func @transform_4(%arg0: i32) -> (i32, i32) {
    %c0_i32 = arith.constant 0 : i32
    %c0_i32_0 = arith.constant 0 : i32
    %c0_i32_1 = arith.constant 0 : i32
    return %c0_i32, %c0_i32_0 : i32, i32
  }
  func.func @transform_5(%arg0: i32) -> (i32, i32) {
    %c0_i32 = arith.constant 0 : i32
    %c0_i32_0 = arith.constant 0 : i32
    return %c0_i32, %arg0 : i32, i32
  }
}

</mosaic_0001>

<llo_original>
// kernel: norm_conv2d_forward.1
$region0: #{norm_conv2d_forward.1}
  #allocation0 [shape = 'u32[]', space=smem, size = 0x4, offset = 0x4, fixed_abs, tag = 'smem constant byte address 0x4 - core index']
  #allocation1 [shape = 'u32[144,128]{1,0:T(1,128)}', space=vmem, size = 0x12000, scoped, tag = 'internal scratch']
  %s0 = inlined_call_operand.vmem [shape: f32[1,4,896], index: 0, kind: input, shape index: {}, may-alias: {0,1}]
  %s1 = inlined_call_operand.vmem [shape: f32[1,4,896], index: 1, kind: input, shape index: {}, may-alias: {0,1}]
  %s2 = inlined_call_operand.vmem [shape: f32[9,8,4], index: 2, kind: input, shape index: {}]
  %s3 = inlined_call_operand.vmem [shape: f32[8,1], index: 3, kind: input, shape index: {}]
  %s4 = inlined_call_operand.vmem [shape: f32[8,1], index: 4, kind: input, shape index: {}]
  %s5 = inlined_call_operand.vmem [shape: f32[8,768], index: 5, kind: output, shape index: {}]
  %s6 = sld [smem:[#allocation0]]
  $region53: #{norm_conv2d_forward.1} parent=0
    _
  %s8 = ssub.s32 1, %s6
  %s9 = scalar_select 0, %s8, %s6
  loop: start=0, step=1, limit=4
  $region2: #{norm_conv2d_forward.1} parent=0 // loop_pre_header
    _
  $region3: #{norm_conv2d_forward.1} parent=0 // loop_header
    %s11 = sphi 0, %s15
    %p12 = scmp.ge.s32.totalorder %s11, 4
    %s21 = sphi 0, %s23
    %s24 = sphi 0, %s21
    %s25 = sphi 0, %s24
    %s41 = sphi 0, %s25
    %s51 = sphi 0, %s53
    %s54 = sphi 0, %s51
    %s55 = sphi 0, %s54
    %s71 = sphi 0, %s55
    %s75 = sphi 0, %s75
    %s77 = sphi 0, %s75
    %s78 = sphi 0, %s77
    %s92 = sphi 0, %s78
    %s96 = sphi 0, %s96
    %s98 = sphi 0, %s96
    %s99 = sphi 0, %s98
    %s113 = sphi 0, %s99
    %s117 = sphi 0, %s117
    %s119 = sphi 0, %s117
    %s120 = sphi 0, %s119
    %s134 = sphi 0, %s120
    %s140 = sphi 0, %s142
    %s143 = sphi 0, %s140
    %s144 = sphi 0, %s143
    %s160 = sphi 0, %s144
  $region4: #{norm_conv2d_forward.1} parent=0 // loop_header_branch
    %14 = sbr.rel (%p12) target = $region8
  $region5: #{norm_conv2d_forward.1} parent=0 // loop_body
    %s16 = ssub.s32 %s11, 1
    %s17 = ssub.s32 %s11, 2
    %s18 = sadd.s32 %s11, 1
    %s19 = ssub.s32 %s11, %s18
    %p20 = scmp.eq.s32.totalorder %s19, 0
    %s22 = sadd.s32 %s21, 1
    %s23 = scalar_select %p20, %s21, %s22
    %p26 = pneg %p20
    %p27 = scmp.eq.s32.totalorder %s11, 1
    %p28 = por %p26, %p27
    %p29 = scmp.ne.s32.totalorder %s21, %s24
    %p30 = scmp.eq.s32.totalorder %s11, 0
    %p31 = por %p29, %p30
    %p32 = scmp.ne.s32.totalorder %s21, %s24
    %p33 = scmp.eq.s32.totalorder %s16, 1
    %p34 = por %p32, %p33
    %p35 = scmp.ne.s32.totalorder %s24, %s25
    %p36 = scmp.eq.s32.totalorder %s16, 0
    %p37 = por %p35, %p36
    %p38 = scmp.ne.s32.totalorder %s24, %s25
    %p39 = scmp.eq.s32.totalorder %s17, 1
    %p40 = por %p38, %p39
    %p42 = scmp.ne.s32.totalorder %s25, %s41
    %p43 = scmp.eq.s32.totalorder %s17, 0
    %p44 = por %p42, %p43
    %s45 = sadd.s32 %s11, 1
    %s46 = smul.u32 %s45, 3
    %s47 = sadd.s32 %s18, 1
    %s48 = smul.u32 %s47, 3
    %s49 = ssub.s32 %s46, %s48
    %p50 = scmp.eq.s32.totalorder %s49, 0
    %s52 = sadd.s32 %s51, 1
    %s53 = scalar_select %p50, %s51, %s52
    %p56 = pneg %p50
    %p57 = scmp.eq.s32.totalorder %s11, 1
    %p58 = por %p56, %p57
    %p59 = scmp.ne.s32.totalorder %s51, %s54
    %p60 = scmp.eq.s32.totalorder %s11, 0
    %p61 = por %p59, %p60
    %p62 = scmp.ne.s32.totalorder %s51, %s54
    %p63 = scmp.eq.s32.totalorder %s16, 1
    %p64 = por %p62, %p63
    %p65 = scmp.ne.s32.totalorder %s54, %s55
    %p66 = scmp.eq.s32.totalorder %s16, 0
    %p67 = por %p65, %p66
    %p68 = scmp.ne.s32.totalorder %s54, %s55
    %p69 = scmp.eq.s32.totalorder %s17, 1
    %p70 = por %p68, %p69
    %p72 = scmp.ne.s32.totalorder %s55, %s71
    %p73 = scmp.eq.s32.totalorder %s17, 0
    %p74 = por %p72, %p73
    %s76 = sadd.s32 %s75, 1
    %p79 = scmp.eq.s32.totalorder %s11, 1
    %p80 = scmp.ne.s32.totalorder %s75, %s77
    %p81 = scmp.eq.s32.totalorder %s11, 0
    %p82 = por %p80, %p81
    %p83 = scmp.ne.s32.totalorder %s75, %s77
    %p84 = scmp.eq.s32.totalorder %s16, 1
    %p85 = por %p83, %p84
    %p86 = scmp.ne.s32.totalorder %s77, %s78
    %p87 = scmp.eq.s32.totalorder %s16, 0
    %p88 = por %p86, %p87
    %p89 = scmp.ne.s32.totalorder %s77, %s78
    %p90 = scmp.eq.s32.totalorder %s17, 1
    %p91 = por %p89, %p90
    %p93 = scmp.ne.s32.totalorder %s78, %s92
    %p94 = scmp.eq.s32.totalorder %s17, 0
    %p95 = por %p93, %p94
    %s97 = sadd.s32 %s96, 1
    %p100 = scmp.eq.s32.totalorder %s11, 1
    %p101 = scmp.ne.s32.totalorder %s96, %s98
    %p102 = scmp.eq.s32.totalorder %s11, 0
    %p103 = por %p101, %p102
    %p104 = scmp.ne.s32.totalorder %s96, %s98
    %p105 = scmp.eq.s32.totalorder %s16, 1
    %p106 = por %p104, %p105
    %p107 = scmp.ne.s32.totalorder %s98, %s99
    %p108 = scmp.eq.s32.totalorder %s16, 0
    %p109 = por %p107, %p108
    %p110 = scmp.ne.s32.totalorder %s98, %s99
    %p111 = scmp.eq.s32.totalorder %s17, 1
    %p112 = por %p110, %p111
    %p114 = scmp.ne.s32.totalorder %s99, %s113
    %p115 = scmp.eq.s32.totalorder %s17, 0
    %p116 = por %p114, %p115
    %s118 = sadd.s32 %s117, 1
    %p121 = scmp.eq.s32.totalorder %s11, 1
    %p122 = scmp.ne.s32.totalorder %s117, %s119
    %p123 = scmp.eq.s32.totalorder %s11, 0
    %p124 = por %p122, %p123
    %p125 = scmp.ne.s32.totalorder %s117, %s119
    %p126 = scmp.eq.s32.totalorder %s16, 1
    %p127 = por %p125, %p126
    %p128 = scmp.ne.s32.totalorder %s119, %s120
    %p129 = scmp.eq.s32.totalorder %s16, 0
    %p130 = por %p128, %p129
    %p131 = scmp.ne.s32.totalorder %s119, %s120
    %p132 = scmp.eq.s32.totalorder %s17, 1
    %p133 = por %p131, %p132
    %p135 = scmp.ne.s32.totalorder %s120, %s134
    %p136 = scmp.eq.s32.totalorder %s17, 0
    %p137 = por %p135, %p136
    %s138 = ssub.s32 %s11, %s18
    %p139 = scmp.eq.s32.totalorder %s138, 0
    %s141 = sadd.s32 %s140, 1
    %s142 = scalar_select %p139, %s140, %s141
    %p145 = pneg %p139
    %p146 = scmp.eq.s32.totalorder %s11, 1
    %p147 = por %p145, %p146
    %p148 = scmp.ne.s32.totalorder %s140, %s143
    %p149 = scmp.eq.s32.totalorder %s11, 0
    %p150 = por %p148, %p149
    %p151 = scmp.ne.s32.totalorder %s140, %s143
    %p152 = scmp.eq.s32.totalorder %s16, 1
    %p153 = por %p151, %p152
    %p154 = scmp.ne.s32.totalorder %s143, %s144
    %p155 = scmp.eq.s32.totalorder %s16, 0
    %p156 = por %p154, %p155
    %p157 = scmp.ne.s32.totalorder %s143, %s144
    %p158 = scmp.eq.s32.totalorder %s17, 1
    %p159 = por %p157, %p158
    %p161 = scmp.ne.s32.totalorder %s144, %s160
    %p162 = scmp.eq.s32.totalorder %s17, 0
    %p163 = por %p161, %p162
    %p164 = scmp.le.s32.totalorder 1, %s11
    %p165 = scmp.lt.s32.totalorder %s11, 3
    %p166 = pnand %p164, %p165
    %p167 = pneg %p166
    // Predicated region
    $region9: #{norm_conv2d_forward.1} parent=5 // pred_check
      _
    $region10: #{norm_conv2d_forward.1} parent=5 // pred_check_branch
      %169 = sbr.rel (%p166) target = $region12
    $region11: #{norm_conv2d_forward.1} parent=5 // pred_region
      %s170 = ssub.s32 %s11, 1
      // Predicated region
      $region13: #{norm_conv2d_forward.1} parent=11 // pred_check
        %p171 = pneg %p88
      $region14: #{norm_conv2d_forward.1} parent=11 // pred_check_branch
        %173 = sbr.rel (%p171) target = $region16
      $region15: #{norm_conv2d_forward.1} parent=11 // pred_region
        _
      $region16: #{norm_conv2d_forward.1} parent=11 // pred_fallthru
        _
      // Predicated region
      $region17: #{norm_conv2d_forward.1} parent=11 // pred_check
        %p174 = pneg %p109
      $region18: #{norm_conv2d_forward.1} parent=11 // pred_check_branch
        %176 = sbr.rel (%p174) target = $region20
      $region19: #{norm_conv2d_forward.1} parent=11 // pred_region
        _
      $region20: #{norm_conv2d_forward.1} parent=11 // pred_fallthru
        _
      // Predicated region
      $region21: #{norm_conv2d_forward.1} parent=11 // pred_check
        %p177 = pneg %p130
      $region22: #{norm_conv2d_forward.1} parent=11 // pred_check_branch
        %179 = sbr.rel (%p177) target = $region24
      $region23: #{norm_conv2d_forward.1} parent=11 // pred_region
        _
      $region24: #{norm_conv2d_forward.1} parent=11 // pred_fallthru
        _
    $region12: #{norm_conv2d_forward.1} parent=5 // pred_fallthru
      _
    %p180 = scmp.lt.s32.totalorder %s11, 2
    // Predicated region
    $region25: #{norm_conv2d_forward.1} parent=5 // pred_check
      %p181 = pneg %p180
    $region26: #{norm_conv2d_forward.1} parent=5 // pred_check_branch
      %183 = sbr.rel (%p181) target = $region28
    $region27: #{norm_conv2d_forward.1} parent=5 // pred_region
      // Predicated region
      $region29: #{norm_conv2d_forward.1} parent=27 // pred_check
        %p184 = pneg %p31
      $region30: #{norm_conv2d_forward.1} parent=27 // pred_check_branch
        %186 = sbr.rel (%p184) target = $region32
      $region31: #{norm_conv2d_forward.1} parent=27 // pred_region
        %s187 = smul.u32 3, %s11
        %s188 = ssub.s32 7, %s187
        %p189 = scmp.lt.s32.totalorder %s188, 3
        %s190 = scalar_select %p189, %s188, 3
        %s191 = smul.u32 64, %s190
        %p192 = scmp.lt.s32.totalorder %s187, 6
        %s193 = scalar_select %p192, %s187, 6
        %s194 = smul.addr %s193, 4
        %s195 = scalar_lea.vmem %s0, %s194
        %s196 = smul.u32 3, %s11
        %s197 = ssub.s32 7, %s196
        %p198 = scmp.lt.s32.totalorder %s197, 3
        %s199 = scalar_select %p198, %s197, 3
        %s200 = smul.u32 64, %s199
      $region32: #{norm_conv2d_forward.1} parent=27 // pred_fallthru
        _
      // Predicated region
      $region33: #{norm_conv2d_forward.1} parent=27 // pred_check
        %p201 = pneg %p61
      $region34: #{norm_conv2d_forward.1} parent=27 // pred_check_branch
        %203 = sbr.rel (%p201) target = $region36
      $region35: #{norm_conv2d_forward.1} parent=27 // pred_region
        %s204 = sadd.s32 %s11, 1
        %s205 = smul.u32 %s204, 3
        %p206 = scmp.lt.s32.totalorder %s205, 6
        %s207 = scalar_select %p206, %s205, 6
        %s208 = smul.addr %s207, 4
        %s209 = scalar_lea.vmem %s1, %s208
        %s210 = sadd.s32 %s11, 1
        %s211 = smul.u32 %s210, 3
      $region36: #{norm_conv2d_forward.1} parent=27 // pred_fallthru
        _
    $region28: #{norm_conv2d_forward.1} parent=5 // pred_fallthru
      _
    %p212 = scmp.le.s32.totalorder 1, %s11
    %p213 = scmp.lt.s32.totalorder %s11, 3
    %p214 = pnand %p212, %p213
    %p215 = pneg %p214
    // Predicated region
    $region37: #{norm_conv2d_forward.1} parent=5 // pred_check
      _
    $region38: #{norm_conv2d_forward.1} parent=5 // pred_check_branch
      %217 = sbr.rel (%p214) target = $region40
    $region39: #{norm_conv2d_forward.1} parent=5 // pred_region
      %s218 = ssub.s32 %s11, 1
      %s219 = smul.u32 3, %s16
      %s220 = ssub.s32 7, %s219
      %p221 = scmp.lt.s32.totalorder %s220, 3
      %s222 = scalar_select %p221, %s220, 3
      %s223 = smul.u32 64, %s222
      %p224 = scmp.lt.s32.totalorder %s219, 6
      %s225 = scalar_select %p224, %s219, 6
      %s226 = smul.addr %s225, 4
      %s227 = scalar_lea.vmem %s0, %s226
      %p228 = pneg %p37
      %p229 = pneg %p34
      %s230 = sadd.s32 %s16, 1
      %s231 = smul.u32 %s230, 3
      %p232 = scmp.lt.s32.totalorder %s231, 6
      %s233 = scalar_select %p232, %s231, 6
      %s234 = smul.addr %s233, 4
      %s235 = scalar_lea.vmem %s1, %s234
      %p236 = pneg %p67
      %p237 = pneg %p64
      %p238 = pneg %p88
      %p239 = pneg %p85
      %p240 = pneg %p109
      %p241 = pneg %p106
      %p242 = pneg %p130
      %p243 = pneg %p127
      %p244 = pneg %p156
      %p245 = pneg %p153
      %s246 = smul.u32 3, %s16
      %p247 = scmp.lt.s32.totalorder %s246, 5
      %s248 = scalar_select %p247, %s246, 5
      %s249 = smul.addr %s248, 8
      %s250 = scalar_lea.vmem %s5, %s249
      %s251 = smul.u32 3, %s16
      %s252 = ssub.s32 7, %s251
      %p253 = scmp.lt.s32.totalorder %s252, 3
      %s254 = scalar_select %p253, %s252, 3
      %s255 = smul.u32 64, %s254
      %p256 = scmp.lt.s32.totalorder %s251, 6
      %s257 = scalar_select %p256, %s251, 6
      %s258 = smul.addr %s257, 4
      %s259 = scalar_lea.vmem %s0, %s258
      %s260 = smul.u32 3, %s16
      %s261 = ssub.s32 7, %s260
      %p262 = scmp.lt.s32.totalorder %s261, 3
      %s263 = scalar_select %p262, %s261, 3
      %s264 = smul.u32 64, %s263
      %s265 = sadd.s32 %s16, 1
      %s266 = smul.u32 %s265, 3
      %p267 = scmp.lt.s32.totalorder %s266, 6
      %s268 = scalar_select %p267, %s266, 6
      %s269 = smul.addr %s268, 4
      %s270 = scalar_lea.vmem %s1, %s269
      %s271 = sadd.s32 %s16, 1
      %s272 = smul.u32 %s271, 3
      %s273 = smul.u32 3, %s16
      %p274 = scmp.lt.s32.totalorder %s273, 5
      %s275 = scalar_select %p274, %s273, 5
      %s276 = smul.addr %s275, 8
      %s277 = scalar_lea.vmem %s5, %s276
      %s278 = smul.u32 3, %s16
      %v279 = vld [vmem:[%s259] sm:$0xff]
      %v280 = vld [vmem:[%s259 + $0x8] sm:$0xf]
      %v281 = vld [vmem:[%s270] sm:$0xf]
      %v284 = vcombine.high %v279, %v279
      %v285 = vld [vmem:[%s2] sm:$0xff]
      %s286 = scalar_lea.vmem %s2, 8
      %v287 = vld [vmem:[%s286] sm:$0xff]
      %289 = vrot.lane.b32.xlu0 %v279, 127
      %v290 = vpop.permute.xlu0 %289
      %291 = vrot.lane.b32.xlu0 %v284, 127
      %v292 = vpop.permute.xlu0 %291
      %293 = vrot.lane.b32.xlu0 %v280, 127
      %v294 = vpop.permute.xlu0 %293
      %295 = vrot.lane.b32.xlu0 %v281, 127
      %v296 = vpop.permute.xlu0 %295
      %vm297 = vcmask 1039360
      %v298 = vsel %vm297, %v290, %v292
      %v299 = vsel %vm297, %v292, %v294
      %v300 = vsel %vm297, %v294, %v296
      %vm301 = vcmask 31744
      %v303 = vsel %vm301, %v287, 0
      %vm305 = vcmask 1043456
      %v306 = vsel %vm305, %v298, 0
      %v308 = vsel %vm305, %v299, 0
      %v310 = vsel %vm305, %v300, 0
      %312 = vmatprep.subr.mxu0 %v308
      %313 = vmatpush1.msra.mxu0 %v306
      %314 = vmatprep.subr.mxu0 0.0
      %315 = vmatpush1.msra.mxu0 0.0
      %316 = vmatprep.subr.mxu0 0.0
      %317 = vmatpush1.msra.mxu0 0.0
      %318 = vmatprep.subr.mxu0 0.0
      %319 = vmatpush1.msra.mxu0 0.0
      %320 = vmatprep.subr.mxu0 0.0
      %321 = vmatpush1.msra.mxu0 0.0
      %322 = vmatprep.subr.mxu0 0.0
      %323 = vmatpush1.msra.mxu0 0.0
      %324 = vmatprep.subr.mxu0 0.0
      %325 = vmatpush1.msra.mxu0 0.0
      %326 = vmatprep.subr.mxu0 0.0
      %327 = vmatpush1.msra.mxu0 0.0
      %328 = vmatprep.subr.mxu0 0.0
      %329 = vmatpush1.msra.mxu0 0.0
      %330 = vmatprep.subr.mxu0 0.0
      %331 = vmatpush1.msra.mxu0 0.0
      %332 = vmatprep.subr.mxu0 0.0
      %333 = vmatpush1.msra.mxu0 0.0
      %334 = vmatprep.subr.mxu0 0.0
      %335 = vmatpush1.msra.mxu0 0.0
      %336 = vmatprep.subr.mxu0 0.0
      %337 = vmatpush1.msra.mxu0 0.0
      %338 = vmatprep.subr.mxu0 0.0
      %339 = vmatpush1.msra.mxu0 0.0
      %340 = vmatprep.subr.mxu0 0.0
      %341 = vmatpush1.msra.mxu0 0.0
      %342 = vmatprep.subr.mxu0 0.0
      %343 = vmatpush1.msra.mxu0 0.0
      %344 = vmatprep.subr.mxu0 0.0
      %345 = vmatpush1.msra.mxu0 0.0
      %346 = vmatprep.subr.mxu0 0.0
      %347 = vmatpush1.msra.mxu0 0.0
      %348 = vmatprep.subr.mxu0 0.0
      %349 = vmatpush1.msra.mxu0 0.0
      %350 = vmatprep.subr.mxu0 0.0
      %351 = vmatpush1.msra.mxu0 0.0
      %352 = vmatprep.subr.mxu0 0.0
      %353 = vmatpush1.msra.mxu0 0.0
      %354 = vmatprep.subr.mxu0 0.0
      %355 = vmatpush1.msra.mxu0 0.0
      %356 = vmatprep.subr.mxu0 0.0
      %357 = vmatpush1.msra.mxu0 0.0
      %358 = vmatprep.subr.mxu0 0.0
      %359 = vmatpush1.msra.mxu0 0.0
      %360 = vmatprep.subr.mxu0 0.0
      %361 = vmatpush1.msra.mxu0 0.0
      %362 = vmatprep.subr.mxu0 0.0
      %363 = vmatpush1.msra.mxu0 0.0
      %364 = vmatprep.subr.mxu0 0.0
      %365 = vmatpush1.msra.mxu0 0.0
      %366 = vmatprep.subr.mxu0 0.0
      %367 = vmatpush1.msra.mxu0 0.0
      %368 = vmatprep.subr.mxu0 0.0
      %369 = vmatpush1.msra.mxu0 0.0
      %370 = vmatprep.subr.mxu0 0.0
      %371 = vmatpush1.msra.mxu0 0.0
      %372 = vmatprep.subr.mxu0 0.0
      %373 = vmatpush1.msra.mxu0 0.0
      %374 = vmatprep.subr.mxu0 0.0
      %375 = vmatpush1.msra.mxu0 0.0
      %376 = vmatprep.mubr.f32.mxu0 0.0
      %377 = vmatmul.mubr.f32.gmra.mrb[0].mxu0 %v303
      %v378 = vpop.f32.mrb[0].mxu0
      %v379 = vadd.f32 0.0, %v378
      %v380 = vpop.f32.mrb[0].mxu0
      %v381 = vadd.f32 0.0, %v380
      %382 = vdwg.mxu0
      %383 = vmatprep.subr.mxu0 0.0
      %384 = vmatpush1.msra.mxu0 %v310
      %385 = vmatprep.subr.mxu0 0.0
      %386 = vmatpush1.msra.mxu0 0.0
      %387 = vmatprep.subr.mxu0 0.0
      %388 = vmatpush1.msra.mxu0 0.0
      %389 = vmatprep.subr.mxu0 0.0
      %390 = vmatpush1.msra.mxu0 0.0
      %391 = vmatprep.subr.mxu0 0.0
      %392 = vmatpush1.msra.mxu0 0.0
      %393 = vmatprep.subr.mxu0 0.0
      %394 = vmatpush1.msra.mxu0 0.0
      %395 = vmatprep.subr.mxu0 0.0
      %396 = vmatpush1.msra.mxu0 0.0
      %397 = vmatprep.subr.mxu0 0.0
      %398 = vmatpush1.msra.mxu0 0.0
      %399 = vmatprep.subr.mxu0 0.0
      %400 = vmatpush1.msra.mxu0 0.0
      %401 = vmatprep.subr.mxu0 0.0
      %402 = vmatpush1.msra.mxu0 0.0
      %403 = vmatprep.subr.mxu0 0.0
      %404 = vmatpush1.msra.mxu0 0.0
      %405 = vmatprep.subr.mxu0 0.0
      %406 = vmatpush1.msra.mxu0 0.0
      %407 = vmatprep.subr.mxu0 0.0
      %408 = vmatpush1.msra.mxu0 0.0
      %409 = vmatprep.subr.mxu0 0.0
      %410 = vmatpush1.msra.mxu0 0.0
      %411 = vmatprep.subr.mxu0 0.0
      %412 = vmatpush1.msra.mxu0 0.0
      %413 = vmatprep.subr.mxu0 0.0
      %414 = vmatpush1.msra.mxu0 0.0
      %415 = vmatprep.subr.mxu0 0.0
      %416 = vmatpush1.msra.mxu0 0.0
      %417 = vmatprep.subr.mxu0 0.0
      %418 = vmatpush1.msra.mxu0 0.0
      %419 = vmatprep.subr.mxu0 0.0
      %420 = vmatpush1.msra.mxu0 0.0
      %421 = vmatprep.subr.mxu0 0.0
      %422 = vmatpush1.msra.mxu0 0.0
      %423 = vmatprep.subr.mxu0 0.0
      %424 = vmatpush1.msra.mxu0 0.0
      %425 = vmatprep.subr.mxu0 0.0
      %426 = vmatpush1.msra.mxu0 0.0
      %427 = vmatprep.subr.mxu0 0.0
      %428 = vmatpush1.msra.mxu0 0.0
      %429 = vmatprep.subr.mxu0 0.0
      %430 = vmatpush1.msra.mxu0 0.0
      %431 = vmatprep.subr.mxu0 0.0
      %432 = vmatpush1.msra.mxu0 0.0
      %433 = vmatprep.subr.mxu0 0.0
      %434 = vmatpush1.msra.mxu0 0.0
      %435 = vmatprep.subr.mxu0 0.0
      %436 = vmatpush1.msra.mxu0 0.0
      %437 = vmatprep.subr.mxu0 0.0
      %438 = vmatpush1.msra.mxu0 0.0
      %439 = vmatprep.subr.mxu0 0.0
      %440 = vmatpush1.msra.mxu0 0.0
      %441 = vmatprep.subr.mxu0 0.0
      %442 = vmatpush1.msra.mxu0 0.0
      %443 = vmatprep.subr.mxu0 0.0
      %444 = vmatpush1.msra.mxu0 0.0
      %445 = vmatprep.subr.mxu0 0.0
      %446 = vmatpush1.msra.mxu0 0.0
      %447 = vmatprep.mubr.f32.mxu0 0.0
      %448 = vmatmul.mubr.f32.gmra.mrb[0].mxu0 %v303
      %v449 = vpop.f32.mrb[0].mxu0
      %v450 = vadd.f32 0.0, %v449
      %v451 = vpop.f32.mrb[0].mxu0
      %452 = vdwg.mxu0
      %v454 = vsel %vm301, %v285, 0
      %v456 = vsel %vm305, %v279, 0
      %v458 = vsel %vm305, %v284, 0
      %v460 = vsel %vm305, %v280, 0
      %462 = vmatprep.subr.mxu0 %v458
      %463 = vmatpush1.msra.mxu0 %v456
      %464 = vmatprep.subr.mxu0 0.0
      %465 = vmatpush1.msra.mxu0 0.0
      %466 = vmatprep.subr.mxu0 0.0
      %467 = vmatpush1.msra.mxu0 0.0
      %468 = vmatprep.subr.mxu0 0.0
      %469 = vmatpush1.msra.mxu0 0.0
      %470 = vmatprep.subr.mxu0 0.0
      %471 = vmatpush1.msra.mxu0 0.0
      %472 = vmatprep.subr.mxu0 0.0
      %473 = vmatpush1.msra.mxu0 0.0
      %474 = vmatprep.subr.mxu0 0.0
      %475 = vmatpush1.msra.mxu0 0.0
      %476 = vmatprep.subr.mxu0 0.0
      %477 = vmatpush1.msra.mxu0 0.0
      %478 = vmatprep.subr.mxu0 0.0
      %479 = vmatpush1.msra.mxu0 0.0
      %480 = vmatprep.subr.mxu0 0.0
      %481 = vmatpush1.msra.mxu0 0.0
      %482 = vmatprep.subr.mxu0 0.0
      %483 = vmatpush1.msra.mxu0 0.0
      %484 = vmatprep.subr.mxu0 0.0
      %485 = vmatpush1.msra.mxu0 0.0
      %486 = vmatprep.subr.mxu0 0.0
      %487 = vmatpush1.msra.mxu0 0.0
      %488 = vmatprep.subr.mxu0 0.0
      %489 = vmatpush1.msra.mxu0 0.0
      %490 = vmatprep.subr.mxu0 0.0
      %491 = vmatpush1.msra.mxu0 0.0
      %492 = vmatprep.subr.mxu0 0.0
      %493 = vmatpush1.msra.mxu0 0.0
      %494 = vmatprep.subr.mxu0 0.0
      %495 = vmatpush1.msra.mxu0 0.0
      %496 = vmatprep.subr.mxu0 0.0
      %497 = vmatpush1.msra.mxu0 0.0
      %498 = vmatprep.subr.mxu0 0.0
      %499 = vmatpush1.msra.mxu0 0.0
      %500 = vmatprep.subr.mxu0 0.0
      %501 = vmatpush1.msra.mxu0 0.0
      %502 = vmatprep.subr.mxu0 0.0
      %503 = vmatpush1.msra.mxu0 0.0
      %504 = vmatprep.subr.mxu0 0.0
      %505 = vmatpush1.msra.mxu0 0.0
      %506 = vmatprep.subr.mxu0 0.0
      %507 = vmatpush1.msra.mxu0 0.0
      %508 = vmatprep.subr.mxu0 0.0
      %509 = vmatpush1.msra.mxu0 0.0
      %510 = vmatprep.subr.mxu0 0.0
      %511 = vmatpush1.msra.mxu0 0.0
      %512 = vmatprep.subr.mxu0 0.0
      %513 = vmatpush1.msra.mxu0 0.0
      %514 = vmatprep.subr.mxu0 0.0
      %515 = vmatpush1.msra.mxu0 0.0
      %516 = vmatprep.subr.mxu0 0.0
      %517 = vmatpush1.msra.mxu0 0.0
      %518 = vmatprep.subr.mxu0 0.0
      %519 = vmatpush1.msra.mxu0 0.0
      %520 = vmatprep.subr.mxu0 0.0
      %521 = vmatpush1.msra.mxu0 0.0
      %522 = vmatprep.subr.mxu0 0.0
      %523 = vmatpush1.msra.mxu0 0.0
      %524 = vmatprep.subr.mxu0 0.0
      %525 = vmatpush1.msra.mxu0 0.0
      %526 = vmatprep.mubr.f32.mxu0 0.0
      %527 = vmatmul.mubr.f32.gmra.mrb[0].mxu0 %v454
      %v528 = vpop.f32.mrb[0].mxu0
      %v529 = vadd.f32 %v379, %v528
      %v530 = vpop.f32.mrb[0].mxu0
      %v531 = vadd.f32 %v381, %v530
      %532 = vdwg.mxu0
      %533 = vmatprep.subr.mxu0 0.0
      %534 = vmatpush1.msra.mxu0 %v460
      %535 = vmatprep.subr.mxu0 0.0
      %536 = vmatpush1.msra.mxu0 0.0
      %537 = vmatprep.subr.mxu0 0.0
      %538 = vmatpush1.msra.mxu0 0.0
      %539 = vmatprep.subr.mxu0 0.0
      %540 = vmatpush1.msra.mxu0 0.0
      %541 = vmatprep.subr.mxu0 0.0
      %542 = vmatpush1.msra.mxu0 0.0
      %543 = vmatprep.subr.mxu0 0.0
      %544 = vmatpush1.msra.mxu0 0.0
      %545 = vmatprep.subr.mxu0 0.0
      %546 = vmatpush1.msra.mxu0 0.0
      %547 = vmatprep.subr.mxu0 0.0
      %548 = vmatpush1.msra.mxu0 0.0
      %549 = vmatprep.subr.mxu0 0.0
      %550 = vmatpush1.msra.mxu0 0.0
      %551 = vmatprep.subr.mxu0 0.0
      %552 = vmatpush1.msra.mxu0 0.0
      %553 = vmatprep.subr.mxu0 0.0
      %554 = vmatpush1.msra.mxu0 0.0
      %555 = vmatprep.subr.mxu0 0.0
      %556 = vmatpush1.msra.mxu0 0.0
      %557 = vmatprep.subr.mxu0 0.0
      %558 = vmatpush1.msra.mxu0 0.0
      %559 = vmatprep.subr.mxu0 0.0
      %560 = vmatpush1.msra.mxu0 0.0
      %561 = vmatprep.subr.mxu0 0.0
      %562 = vmatpush1.msra.mxu0 0.0
      %563 = vmatprep.subr.mxu0 0.0
      %564 = vmatpush1.msra.mxu0 0.0
      %565 = vmatprep.subr.mxu0 0.0
      %566 = vmatpush1.msra.mxu0 0.0
      %567 = vmatprep.subr.mxu0 0.0
      %568 = vmatpush1.msra.mxu0 0.0
      %569 = vmatprep.subr.mxu0 0.0
      %570 = vmatpush1.msra.mxu0 0.0
      %571 = vmatprep.subr.mxu0 0.0
      %572 = vmatpush1.msra.mxu0 0.0
      %573 = vmatprep.subr.mxu0 0.0
      %574 = vmatpush1.msra.mxu0 0.0
      %575 = vmatprep.subr.mxu0 0.0
      %576 = vmatpush1.msra.mxu0 0.0
      %577 = vmatprep.subr.mxu0 0.0
      %578 = vmatpush1.msra.mxu0 0.0
      %579 = vmatprep.subr.mxu0 0.0
      %580 = vmatpush1.msra.mxu0 0.0
      %581 = vmatprep.subr.mxu0 0.0
      %582 = vmatpush1.msra.mxu0 0.0
      %583 = vmatprep.subr.mxu0 0.0
      %584 = vmatpush1.msra.mxu0 0.0
      %585 = vmatprep.subr.mxu0 0.0
      %586 = vmatpush1.msra.mxu0 0.0
      %587 = vmatprep.subr.mxu0 0.0
      %588 = vmatpush1.msra.mxu0 0.0
      %589 = vmatprep.subr.mxu0 0.0
      %590 = vmatpush1.msra.mxu0 0.0
      %591 = vmatprep.subr.mxu0 0.0
      %592 = vmatpush1.msra.mxu0 0.0
      %593 = vmatprep.subr.mxu0 0.0
      %594 = vmatpush1.msra.mxu0 0.0
      %595 = vmatprep.subr.mxu0 0.0
      %596 = vmatpush1.msra.mxu0 0.0
      %597 = vmatprep.mubr.f32.mxu0 0.0
      %598 = vmatmul.mubr.f32.gmra.mrb[0].mxu0 %v454
      %v599 = vpop.f32.mrb[0].mxu0
      %v600 = vadd.f32 %v450, %v599
      %v601 = vpop.f32.mrb[0].mxu0
      %602 = vdwg.mxu0
      %s603 = scalar_lea.vmem %s2, 16
      %v604 = vld [vmem:[%s603] sm:$0xff]
      %605 = vrot.lane.b32.xlu0 %v279, 126
      %v606 = vpop.permute.xlu0 %605
      %607 = vrot.lane.b32.xlu0 %v284, 126
      %v608 = vpop.permute.xlu0 %607
      %609 = vrot.lane.b32.xlu0 %v280, 126
      %v610 = vpop.permute.xlu0 %609
      %611 = vrot.lane.b32.xlu0 %v281, 126
      %v612 = vpop.permute.xlu0 %611
      %vm613 = vcmask 1031168
      %v614 = vsel %vm613, %v606, %v608
      %v615 = vsel %vm613, %v608, %v610
      %v616 = vsel %vm613, %v610, %v612
      %v618 = vsel %vm301, %v604, 0
      %v620 = vsel %vm305, %v614, 0
      %v622 = vsel %vm305, %v615, 0
      %v624 = vsel %vm305, %v616, 0
      %626 = vmatprep.subr.mxu0 %v622
      %627 = vmatpush1.msra.mxu0 %v620
      %628 = vmatprep.subr.mxu0 0.0
      %629 = vmatpush1.msra.mxu0 0.0
      %630 = vmatprep.subr.mxu0 0.0
      %631 = vmatpush1.msra.mxu0 0.0
      %632 = vmatprep.subr.mxu0 0.0
      %633 = vmatpush1.msra.mxu0 0.0
      %634 = vmatprep.subr.mxu0 0.0
      %635 = vmatpush1.msra.mxu0 0.0
      %636 = vmatprep.subr.mxu0 0.0
      %637 = vmatpush1.msra.mxu0 0.0
      %638 = vmatprep.subr.mxu0 0.0
      %639 = vmatpush1.msra.mxu0 0.0
      %640 = vmatprep.subr.mxu0 0.0
      %641 = vmatpush1.msra.mxu0 0.0
      %642 = vmatprep.subr.mxu0 0.0
      %643 = vmatpush1.msra.mxu0 0.0
      %644 = vmatprep.subr.mxu0 0.0
      %645 = vmatpush1.msra.mxu0 0.0
      %646 = vmatprep.subr.mxu0 0.0
      %647 = vmatpush1.msra.mxu0 0.0
      %648 = vmatprep.subr.mxu0 0.0
      %649 = vmatpush1.msra.mxu0 0.0
      %650 = vmatprep.subr.mxu0 0.0
      %651 = vmatpush1.msra.mxu0 0.0
      %652 = vmatprep.subr.mxu0 0.0
      %653 = vmatpush1.msra.mxu0 0.0
      %654 = vmatprep.subr.mxu0 0.0
      %655 = vmatpush1.msra.mxu0 0.0
      %656 = vmatprep.subr.mxu0 0.0
      %657 = vmatpush1.msra.mxu0 0.0
      %658 = vmatprep.subr.mxu0 0.0
      %659 = vmatpush1.msra.mxu0 0.0
      %660 = vmatprep.subr.mxu0 0.0
      %661 = vmatpush1.msra.mxu0 0.0
      %662 = vmatprep.subr.mxu0 0.0
      %663 = vmatpush1.msra.mxu0 0.0
      %664 = vmatprep.subr.mxu0 0.0
      %665 = vmatpush1.msra.mxu0 0.0
      %666 = vmatprep.subr.mxu0 0.0
      %667 = vmatpush1.msra.mxu0 0.0
      %668 = vmatprep.subr.mxu0 0.0
      %669 = vmatpush1.msra.mxu0 0.0
      %670 = vmatprep.subr.mxu0 0.0
      %671 = vmatpush1.msra.mxu0 0.0
      %672 = vmatprep.subr.mxu0 0.0
      %673 = vmatpush1.msra.mxu0 0.0
      %674 = vmatprep.subr.mxu0 0.0
      %675 = vmatpush1.msra.mxu0 0.0
      %676 = vmatprep.subr.mxu0 0.0
      %677 = vmatpush1.msra.mxu0 0.0
      %678 = vmatprep.subr.mxu0 0.0
      %679 = vmatpush1.msra.mxu0 0.0
      %680 = vmatprep.subr.mxu0 0.0
      %681 = vmatpush1.msra.mxu0 0.0
      %682 = vmatprep.subr.mxu0 0.0
      %683 = vmatpush1.msra.mxu0 0.0
      %684 = vmatprep.subr.mxu0 0.0
      %685 = vmatpush1.msra.mxu0 0.0
      %686 = vmatprep.subr.mxu0 0.0
      %687 = vmatpush1.msra.mxu0 0.0
      %688 = vmatprep.subr.mxu0 0.0
      %689 = vmatpush1.msra.mxu0 0.0
      %690 = vmatprep.mubr.f32.mxu0 0.0
      %691 = vmatmul.mubr.f32.gmra.mrb[0].mxu0 %v618
      %v692 = vpop.f32.mrb[0].mxu0
      %v693 = vadd.f32 0.0, %v692
      %v694 = vpop.f32.mrb[0].mxu0
      %v695 = vadd.f32 0.0, %v694
      %696 = vdwg.mxu0
      %697 = vmatprep.subr.mxu0 0.0
      %698 = vmatpush1.msra.mxu0 %v624
      %699 = vmatprep.subr.mxu0 0.0
      %700 = vmatpush1.msra.mxu0 0.0
      %701 = vmatprep.subr.mxu0 0.0
      %702 = vmatpush1.msra.mxu0 0.0
      %703 = vmatprep.subr.mxu0 0.0
      %704 = vmatpush1.msra.mxu0 0.0
      %705 = vmatprep.subr.mxu0 0.0
      %706 = vmatpush1.msra.mxu0 0.0
      %707 = vmatprep.subr.mxu0 0.0
      %708 = vmatpush1.msra.mxu0 0.0
      %709 = vmatprep.subr.mxu0 0.0
      %710 = vmatpush1.msra.mxu0 0.0
      %711 = vmatprep.subr.mxu0 0.0
      %712 = vmatpush1.msra.mxu0 0.0
      %713 = vmatprep.subr.mxu0 0.0
      %714 = vmatpush1.msra.mxu0 0.0
      %715 = vmatprep.subr.mxu0 0.0
      %716 = vmatpush1.msra.mxu0 0.0
      %717 = vmatprep.subr.mxu0 0.0
      %718 = vmatpush1.msra.mxu0 0.0
      %719 = vmatprep.subr.mxu0 0.0
      %720 = vmatpush1.msra.mxu0 0.0
      %721 = vmatprep.subr.mxu0 0.0
      %722 = vmatpush1.msra.mxu0 0.0
      %723 = vmatprep.subr.mxu0 0.0
      %724 = vmatpush1.msra.mxu0 0.0
      %725 = vmatprep.subr.mxu0 0.0
      %726 = vmatpush1.msra.mxu0 0.0
      %727 = vmatprep.subr.mxu0 0.0
      %728 = vmatpush1.msra.mxu0 0.0
      %729 = vmatprep.subr.mxu0 0.0
      %730 = vmatpush1.msra.mxu0 0.0
      %731 = vmatprep.subr.mxu0 0.0
      %732 = vmatpush1.msra.mxu0 0.0
      %733 = vmatprep.subr.mxu0 0.0
      %734 = vmatpush1.msra.mxu0 0.0
      %735 = vmatprep.subr.mxu0 0.0
      %736 = vmatpush1.msra.mxu0 0.0
      %737 = vmatprep.subr.mxu0 0.0
      %738 = vmatpush1.msra.mxu0 0.0
      %739 = vmatprep.subr.mxu0 0.0
      %740 = vmatpush1.msra.mxu0 0.0
      %741 = vmatprep.subr.mxu0 0.0
      %742 = vmatpush1.msra.mxu0 0.0
      %743 = vmatprep.subr.mxu0 0.0
      %744 = vmatpush1.msra.mxu0 0.0
      %745 = vmatprep.subr.mxu0 0.0
      %746 = vmatpush1.msra.mxu0 0.0
      %747 = vmatprep.subr.mxu0 0.0
      %748 = vmatpush1.msra.mxu0 0.0
      %749 = vmatprep.subr.mxu0 0.0
      %750 = vmatpush1.msra.mxu0 0.0
      %751 = vmatprep.subr.mxu0 0.0
      %752 = vmatpush1.msra.mxu0 0.0
      %753 = vmatprep.subr.mxu0 0.0
      %754 = vmatpush1.msra.mxu0 0.0
      %755 = vmatprep.subr.mxu0 0.0
      %756 = vmatpush1.msra.mxu0 0.0
      %757 = vmatprep.subr.mxu0 0.0
      %758 = vmatpush1.msra.mxu0 0.0
      %759 = vmatprep.subr.mxu0 0.0
      %760 = vmatpush1.msra.mxu0 0.0
      %761 = vmatprep.mubr.f32.mxu0 0.0
      %762 = vmatmul.mubr.f32.gmra.mrb[0].mxu0 %v618
      %v763 = vpop.f32.mrb[0].mxu0
      %v764 = vadd.f32 0.0, %v763
      %v765 = vpop.f32.mrb[0].mxu0
      %766 = vdwg.mxu0
      %v767 = vadd.f32 %v529, %v693
      %v768 = vadd.f32 %v531, %v695
      %v769 = vadd.f32 %v600, %v764
      %s770 = scalar_lea.vmem %s2, 24
      %v771 = vld [vmem:[%s770] sm:$0xff]
      %772 = vrot.lane.b32.xlu0 %v279, 110
      %v773 = vpop.permute.xlu0 %772
      %774 = vrot.lane.b32.xlu0 %v284, 110
      %v775 = vpop.permute.xlu0 %774
      %776 = vrot.lane.b32.xlu0 %v280, 110
      %v777 = vpop.permute.xlu0 %776
      %778 = vrot.lane.b32.xlu0 %v281, 110
      %v779 = vpop.permute.xlu0 %778
      %vm780 = vcmask 900096
      %v781 = vsel %vm780, %v773, %v775
      %v782 = vsel %vm780, %v775, %v777
      %v783 = vsel %vm780, %v777, %v779
      %v785 = vsel %vm301, %v771, 0
      %v787 = vsel %vm305, %v781, 0
      %v789 = vsel %vm305, %v782, 0
      %v791 = vsel %vm305, %v783, 0
      %793 = vmatprep.subr.mxu0 %v789
      %794 = vmatpush1.msra.mxu0 %v787
      %795 = vmatprep.subr.mxu0 0.0
      %796 = vmatpush1.msra.mxu0 0.0
      %797 = vmatprep.subr.mxu0 0.0
      %798 = vmatpush1.msra.mxu0 0.0
      %799 = vmatprep.subr.mxu0 0.0
      %800 = vmatpush1.msra.mxu0 0.0
      %801 = vmatprep.subr.mxu0 0.0
      %802 = vmatpush1.msra.mxu0 0.0
      %803 = vmatprep.subr.mxu0 0.0
      %804 = vmatpush1.msra.mxu0 0.0
      %805 = vmatprep.subr.mxu0 0.0
      %806 = vmatpush1.msra.mxu0 0.0
      %807 = vmatprep.subr.mxu0 0.0
      %808 = vmatpush1.msra.mxu0 0.0
      %809 = vmatprep.subr.mxu0 0.0
      %810 = vmatpush1.msra.mxu0 0.0
      %811 = vmatprep.subr.mxu0 0.0
      %812 = vmatpush1.msra.mxu0 0.0
      %813 = vmatprep.subr.mxu0 0.0
      %814 = vmatpush1.msra.mxu0 0.0
      %815 = vmatprep.subr.mxu0 0.0
      %816 = vmatpush1.msra.mxu0 0.0
      %817 = vmatprep.subr.mxu0 0.0
      %818 = vmatpush1.msra.mxu0 0.0
      %819 = vmatprep.subr.mxu0 0.0
      %820 = vmatpush1.msra.mxu0 0.0
      %821 = vmatprep.subr.mxu0 0.0
      %822 = vmatpush1.msra.mxu0 0.0
      %823 = vmatprep.subr.mxu0 0.0
      %824 = vmatpush1.msra.mxu0 0.0
      %825 = vmatprep.subr.mxu0 0.0
      %826 = vmatpush1.msra.mxu0 0.0
      %827 = vmatprep.subr.mxu0 0.0
      %828 = vmatpush1.msra.mxu0 0.0
      %829 = vmatprep.subr.mxu0 0.0
      %830 = vmatpush1.msra.mxu0 0.0
      %831 = vmatprep.subr.mxu0 0.0
      %832 = vmatpush1.msra.mxu0 0.0
      %833 = vmatprep.subr.mxu0 0.0
      %834 = vmatpush1.msra.mxu0 0.0
      %835 = vmatprep.subr.mxu0 0.0
      %836 = vmatpush1.msra.mxu0 0.0
      %837 = vmatprep.subr.mxu0 0.0
      %838 = vmatpush1.msra.mxu0 0.0
      %839 = vmatprep.subr.mxu0 0.0
      %840 = vmatpush1.msra.mxu0 0.0
      %841 = vmatprep.subr.mxu0 0.0
      %842 = vmatpush1.msra.mxu0 0.0
      %843 = vmatprep.subr.mxu0 0.0
      %844 = vmatpush1.msra.mxu0 0.0
      %845 = vmatprep.subr.mxu0 0.0
      %846 = vmatpush1.msra.mxu0 0.0
      %847 = vmatprep.subr.mxu0 0.0
      %848 = vmatpush1.msra.mxu0 0.0
      %849 = vmatprep.subr.mxu0 0.0
      %850 = vmatpush1.msra.mxu0 0.0
      %851 = vmatprep.subr.mxu0 0.0
      %852 = vmatpush1.msra.mxu0 0.0
      %853 = vmatprep.subr.mxu0 0.0
      %854 = vmatpush1.msra.mxu0 0.0
      %855 = vmatprep.subr.mxu0 0.0
      %856 = vmatpush1.msra.mxu0 0.0
      %857 = vmatprep.mubr.f32.mxu0 0.0
      %858 = vmatmul.mubr.f32.gmra.mrb[0].mxu0 %v785
      %v859 = vpop.f32.mrb[0].mxu0
      %v860 = vadd.f32 0.0, %v859
      %v861 = vpop.f32.mrb[0].mxu0
      %v862 = vadd.f32 0.0, %v861
      %863 = vdwg.mxu0
      %864 = vmatprep.subr.mxu0 0.0
      %865 = vmatpush1.msra.mxu0 %v791
      %866 = vmatprep.subr.mxu0 0.0
      %867 = vmatpush1.msra.mxu0 0.0
      %868 = vmatprep.subr.mxu0 0.0
      %869 = vmatpush1.msra.mxu0 0.0
      %870 = vmatprep.subr.mxu0 0.0
      %871 = vmatpush1.msra.mxu0 0.0
      %872 = vmatprep.subr.mxu0 0.0
      %873 = vmatpush1.msra.mxu0 0.0
      %874 = vmatprep.subr.mxu0 0.0
      %875 = vmatpush1.msra.mxu0 0.0
      %876 = vmatprep.subr.mxu0 0.0
      %877 = vmatpush1.msra.mxu0 0.0
      %878 = vmatprep.subr.mxu0 0.0
      %879 = vmatpush1.msra.mxu0 0.0
      %880 = vmatprep.subr.mxu0 0.0
      %881 = vmatpush1.msra.mxu0 0.0
      %882 = vmatprep.subr.mxu0 0.0
      %883 = vmatpush1.msra.mxu0 0.0
      %884 = vmatprep.subr.mxu0 0.0
      %885 = vmatpush1.msra.mxu0 0.0
      %886 = vmatprep.subr.mxu0 0.0
      %887 = vmatpush1.msra.mxu0 0.0
      %888 = vmatprep.subr.mxu0 0.0
      %889 = vmatpush1.msra.mxu0 0.0
      %890 = vmatprep.subr.mxu0 0.0
      %891 = vmatpush1.msra.mxu0 0.0
      %892 = vmatprep.subr.mxu0 0.0
      %893 = vmatpush1.msra.mxu0 0.0
      %894 = vmatprep.subr.mxu0 0.0
      %895 = vmatpush1.msra.mxu0 0.0
      %896 = vmatprep.subr.mxu0 0.0
      %897 = vmatpush1.msra.mxu0 0.0
      %898 = vmatprep.subr.mxu0 0.0
      %899 = vmatpush1.msra.mxu0 0.0
      %900 = vmatprep.subr.mxu0 0.0
      %901 = vmatpush1.msra.mxu0 0.0
      %902 = vmatprep.subr.mxu0 0.0
      %903 = vmatpush1.msra.mxu0 0.0
      %904 = vmatprep.subr.mxu0 0.0
      %905 = vmatpush1.msra.mxu0 0.0
      %906 = vmatprep.subr.mxu0 0.0
      %907 = vmatpush1.msra.mxu0 0.0
      %908 = vmatprep.subr.mxu0 0.0
      %909 = vmatpush1.msra.mxu0 0.0
      %910 = vmatprep.subr.mxu0 0.0
      %911 = vmatpush1.msra.mxu0 0.0
      %912 = vmatprep.subr.mxu0 0.0
      %913 = vmatpush1.msra.mxu0 0.0
      %914 = vmatprep.subr.mxu0 0.0
      %915 = vmatpush1.msra.mxu0 0.0
      %916 = vmatprep.subr.mxu0 0.0
      %917 = vmatpush1.msra.mxu0 0.0
      %918 = vmatprep.subr.mxu0 0.0
      %919 = vmatpush1.msra.mxu0 0.0
      %920 = vmatprep.subr.mxu0 0.0
      %921 = vmatpush1.msra.mxu0 0.0
      %922 = vmatprep.subr.mxu0 0.0
      %923 = vmatpush1.msra.mxu0 0.0
      %924 = vmatprep.subr.mxu0 0.0
      %925 = vmatpush1.msra.mxu0 0.0
      %926 = vmatprep.subr.mxu0 0.0
      %927 = vmatpush1.msra.mxu0 0.0
      %928 = vmatprep.mubr.f32.mxu0 0.0
      %929 = vmatmul.mubr.f32.gmra.mrb[0].mxu0 %v785
      %v930 = vpop.f32.mrb[0].mxu0
      %v931 = vadd.f32 0.0, %v930
      %v932 = vpop.f32.mrb[0].mxu0
      %933 = vdwg.mxu0
      %v934 = vadd.f32 %v767, %v860
      %v935 = vadd.f32 %v768, %v862
      %v936 = vadd.f32 %v769, %v931
      %s937 = scalar_lea.vmem %s2, 32
      %v938 = vld [vmem:[%s937] sm:$0xff]
      %939 = vrot.lane.b32.xlu0 %v279, 109
      %v940 = vpop.permute.xlu0 %939
      %941 = vrot.lane.b32.xlu0 %v284, 109
      %v942 = vpop.permute.xlu0 %941
      %943 = vrot.lane.b32.xlu0 %v280, 109
      %v944 = vpop.permute.xlu0 %943
      %945 = vrot.lane.b32.xlu0 %v281, 109
      %v946 = vpop.permute.xlu0 %945
      %vm947 = vcmask 891904
      %v948 = vsel %vm947, %v940, %v942
      %v949 = vsel %vm947, %v942, %v944
      %v950 = vsel %vm947, %v944, %v946
      %v952 = vsel %vm301, %v938, 0
      %v954 = vsel %vm305, %v948, 0
      %v956 = vsel %vm305, %v949, 0
      %v958 = vsel %vm305, %v950, 0
      %960 = vmatprep.subr.mxu0 %v956
      %961 = vmatpush1.msra.mxu0 %v954
      %962 = vmatprep.subr.mxu0 0.0
      %963 = vmatpush1.msra.mxu0 0.0
      %964 = vmatprep.subr.mxu0 0.0
      %965 = vmatpush1.msra.mxu0 0.0
      %966 = vmatprep.subr.mxu0 0.0
      %967 = vmatpush1.msra.mxu0 0.0
      %968 = vmatprep.subr.mxu0 0.0
      %969 = vmatpush1.msra.mxu0 0.0
      %970 = vmatprep.subr.mxu0 0.0
      %971 = vmatpush1.msra.mxu0 0.0
      %972 = vmatprep.subr.mxu0 0.0
      %973 = vmatpush1.msra.mxu0 0.0
      %974 = vmatprep.subr.mxu0 0.0
      %975 = vmatpush1.msra.mxu0 0.0
      %976 = vmatprep.subr.mxu0 0.0
      %977 = vmatpush1.msra.mxu0 0.0
      %978 = vmatprep.subr.mxu0 0.0
      %979 = vmatpush1.msra.mxu0 0.0
      %980 = vmatprep.subr.mxu0 0.0
      %981 = vmatpush1.msra.mxu0 0.0
      %982 = vmatprep.subr.mxu0 0.0
      %983 = vmatpush1.msra.mxu0 0.0
      %984 = vmatprep.subr.mxu0 0.0
      %985 = vmatpush1.msra.mxu0 0.0
      %986 = vmatprep.subr.mxu0 0.0
      %987 = vmatpush1.msra.mxu0 0.0
      %988 = vmatprep.subr.mxu0 0.0
      %989 = vmatpush1.msra.mxu0 0.0
      %990 = vmatprep.subr.mxu0 0.0
      %991 = vmatpush1.msra.mxu0 0.0
      %992 = vmatprep.subr.mxu0 0.0
      %993 = vmatpush1.msra.mxu0 0.0
      %994 = vmatprep.subr.mxu0 0.0
      %995 = vmatpush1.msra.mxu0 0.0
      %996 = vmatprep.subr.mxu0 0.0
      %997 = vmatpush1.msra.mxu0 0.0
      %998 = vmatprep.subr.mxu0 0.0
      %999 = vmatpush1.msra.mxu0 0.0
      %1000 = vmatprep.subr.mxu0 0.0
      %1001 = vmatpush1.msra.mxu0 0.0
      %1002 = vmatprep.subr.mxu0 0.0
      %1003 = vmatpush1.msra.mxu0 0.0
      %1004 = vmatprep.subr.mxu0 0.0
      %1005 = vmatpush1.msra.mxu0 0.0
      %1006 = vmatprep.subr.mxu0 0.0
      %1007 = vmatpush1.msra.mxu0 0.0
      %1008 = vmatprep.subr.mxu0 0.0
      %1009 = vmatpush1.msra.mxu0 0.0
      %1010 = vmatprep.subr.mxu0 0.0
      %1011 = vmatpush1.msra.mxu0 0.0
      %1012 = vmatprep.subr.mxu0 0.0
      %1013 = vmatpush1.msra.mxu0 0.0
      %1014 = vmatprep.subr.mxu0 0.0
      %1015 = vmatpush1.msra.mxu0 0.0
      %1016 = vmatprep.subr.mxu0 0.0
      %1017 = vmatpush1.msra.mxu0 0.0
      %1018 = vmatprep.subr.mxu0 0.0
      %1019 = vmatpush1.msra.mxu0 0.0
      %1020 = vmatprep.subr.mxu0 0.0
      %1021 = vmatpush1.msra.mxu0 0.0
      %1022 = vmatprep.subr.mxu0 0.0
      %1023 = vmatpush1.msra.mxu0 0.0
      %1024 = vmatprep.mubr.f32.mxu0 0.0
      %1025 = vmatmul.mubr.f32.gmra.mrb[0].mxu0 %v952
      %v1026 = vpop.f32.mrb[0].mxu0
      %v1027 = vadd.f32 0.0, %v1026
      %v1028 = vpop.f32.mrb[0].mxu0
      %v1029 = vadd.f32 0.0, %v1028
      %1030 = vdwg.mxu0
      %1031 = vmatprep.subr.mxu0 0.0
      %1032 = vmatpush1.msra.mxu0 %v958
      %1033 = vmatprep.subr.mxu0 0.0
      %1034 = vmatpush1.msra.mxu0 0.0
      %1035 = vmatprep.subr.mxu0 0.0
      %1036 = vmatpush1.msra.mxu0 0.0
      %1037 = vmatprep.subr.mxu0 0.0
      %1038 = vmatpush1.msra.mxu0 0.0
      %1039 = vmatprep.subr.mxu0 0.0
      %1040 = vmatpush1.msra.mxu0 0.0
      %1041 = vmatprep.subr.mxu0 0.0
      %1042 = vmatpush1.msra.mxu0 0.0
      %1043 = vmatprep.subr.mxu0 0.0
      %1044 = vmatpush1.msra.mxu0 0.0
      %1045 = vmatprep.subr.mxu0 0.0
      %1046 = vmatpush1.msra.mxu0 0.0
      %1047 = vmatprep.subr.mxu0 0.0
      %1048 = vmatpush1.msra.mxu0 0.0
      %1049 = vmatprep.subr.mxu0 0.0
      %1050 = vmatpush1.msra.mxu0 0.0
      %1051 = vmatprep.subr.mxu0 0.0
      %1052 = vmatpush1.msra.mxu0 0.0
      %1053 = vmatprep.subr.mxu0 0.0
      %1054 = vmatpush1.msra.mxu0 0.0
      %1055 = vmatprep.subr.mxu0 0.0
      %1056 = vmatpush1.msra.mxu0 0.0
      %1057 = vmatprep.subr.mxu0 0.0
      %1058 = vmatpush1.msra.mxu0 0.0
      %1059 = vmatprep.subr.mxu0 0.0
      %1060 = vmatpush1.msra.mxu0 0.0
      %1061 = vmatprep.subr.mxu0 0.0
      %1062 = vmatpush1.msra.mxu0 0.0
      %1063 = vmatprep.subr.mxu0 0.0
      %1064 = vmatpush1.msra.mxu0 0.0
      %1065 = vmatprep.subr.mxu0 0.0
      %1066 = vmatpush1.msra.mxu0 0.0
      %1067 = vmatprep.subr.mxu0 0.0
      %1068 = vmatpush1.msra.mxu0 0.0
      %1069 = vmatprep.subr.mxu0 0.0
      %1070 = vmatpush1.msra.mxu0 0.0
      %1071 = vmatprep.subr.mxu0 0.0
      %1072 = vmatpush1.msra.mxu0 0.0
      %1073 = vmatprep.subr.mxu0 0.0
      %1074 = vmatpush1.msra.mxu0 0.0
      %1075 = vmatprep.subr.mxu0 0.0
      %1076 = vmatpush1.msra.mxu0 0.0
      %1077 = vmatprep.subr.mxu0 0.0
      %1078 = vmatpush1.msra.mxu0 0.0
      %1079 = vmatprep.subr.mxu0 0.0
      %1080 = vmatpush1.msra.mxu0 0.0
      %1081 = vmatprep.subr.mxu0 0.0
      %1082 = vmatpush1.msra.mxu0 0.0
      %1083 = vmatprep.subr.mxu0 0.0
      %1084 = vmatpush1.msra.mxu0 0.0
      %1085 = vmatprep.subr.mxu0 0.0
      %1086 = vmatpush1.msra.mxu0 0.0
      %1087 = vmatprep.subr.mxu0 0.0
      %1088 = vmatpush1.msra.mxu0 0.0
      %1089 = vmatprep.subr.mxu0 0.0
      %1090 = vmatpush1.msra.mxu0 0.0
      %1091 = vmatprep.subr.mxu0 0.0
      %1092 = vmatpush1.msra.mxu0 0.0
      %1093 = vmatprep.subr.mxu0 0.0
      %1094 = vmatpush1.msra.mxu0 0.0
      %1095 = vmatprep.mubr.f32.mxu0 0.0
      %1096 = vmatmul.mubr.f32.gmra.mrb[0].mxu0 %v952
      %v1097 = vpop.f32.mrb[0].mxu0
      %v1098 = vadd.f32 0.0, %v1097
      %v1099 = vpop.f32.mrb[0].mxu0
      %1100 = vdwg.mxu0
      %v1101 = vadd.f32 %v934, %v1027
      %v1102 = vadd.f32 %v935, %v1029
      %v1103 = vadd.f32 %v936, %v1098
      %s1104 = scalar_lea.vmem %s2, 40
      %v1105 = vld [vmem:[%s1104] sm:$0xff]
      %1106 = vrot.lane.b32.xlu0 %v279, 108
      %v1107 = vpop.permute.xlu0 %1106
      %1108 = vrot.lane.b32.xlu0 %v284, 108
      %v1109 = vpop.permute.xlu0 %1108
      %1110 = vrot.lane.b32.xlu0 %v280, 108
      %v1111 = vpop.permute.xlu0 %1110
      %1112 = vrot.lane.b32.xlu0 %v281, 108
      %v1113 = vpop.permute.xlu0 %1112
      %vm1114 = vcmask 883712
      %v1115 = vsel %vm1114, %v1107, %v1109
      %v1116 = vsel %vm1114, %v1109, %v1111
      %v1117 = vsel %vm1114, %v1111, %v1113
      %v1119 = vsel %vm301, %v1105, 0
      %v1121 = vsel %vm305, %v1115, 0
      %v1123 = vsel %vm305, %v1116, 0
      %v1125 = vsel %vm305, %v1117, 0
      %1127 = vmatprep.subr.mxu0 %v1123
      %1128 = vmatpush1.msra.mxu0 %v1121
      %1129 = vmatprep.subr.mxu0 0.0
      %1130 = vmatpush1.msra.mxu0 0.0
      %1131 = vmatprep.subr.mxu0 0.0
      %1132 = vmatpush1.msra.mxu0 0.0
      %1133 = vmatprep.subr.mxu0 0.0
      %1134 = vmatpush1.msra.mxu0 0.0
      %1135 = vmatprep.subr.mxu0 0.0
      %1136 = vmatpush1.msra.mxu0 0.0
      %1137 = vmatprep.subr.mxu0 0.0
      %1138 = vmatpush1.msra.mxu0 0.0
      %1139 = vmatprep.subr.mxu0 0.0
      %1140 = vmatpush1.msra.mxu0 0.0
      %1141 = vmatprep.subr.mxu0 0.0
      %1142 = vmatpush1.msra.mxu0 0.0
      %1143 = vmatprep.subr.mxu0 0.0
      %1144 = vmatpush1.msra.mxu0 0.0
      %1145 = vmatprep.subr.mxu0 0.0
      %1146 = vmatpush1.msra.mxu0 0.0
      %1147 = vmatprep.subr.mxu0 0.0
      %1148 = vmatpush1.msra.mxu0 0.0
      %1149 = vmatprep.subr.mxu0 0.0
      %1150 = vmatpush1.msra.mxu0 0.0
      %1151 = vmatprep.subr.mxu0 0.0
      %1152 = vmatpush1.msra.mxu0 0.0
      %1153 = vmatprep.subr.mxu0 0.0
      %1154 = vmatpush1.msra.mxu0 0.0
      %1155 = vmatprep.subr.mxu0 0.0
      %1156 = vmatpush1.msra.mxu0 0.0
      %1157 = vmatprep.subr.mxu0 0.0
      %1158 = vmatpush1.msra.mxu0 0.0
      %1159 = vmatprep.subr.mxu0 0.0
      %1160 = vmatpush1.msra.mxu0 0.0
      %1161 = vmatprep.subr.mxu0 0.0
      %1162 = vmatpush1.msra.mxu0 0.0
      %1163 = vmatprep.subr.mxu0 0.0
      %1164 = vmatpush1.msra.mxu0 0.0
      %1165 = vmatprep.subr.mxu0 0.0
      %1166 = vmatpush1.msra.mxu0 0.0
      %1167 = vmatprep.subr.mxu0 0.0
      %1168 = vmatpush1.msra.mxu0 0.0
      %1169 = vmatprep.subr.mxu0 0.0
      %1170 = vmatpush1.msra.mxu0 0.0
      %1171 = vmatprep.subr.mxu0 0.0
      %1172 = vmatpush1.msra.mxu0 0.0
      %1173 = vmatprep.subr.mxu0 0.0
      %1174 = vmatpush1.msra.mxu0 0.0
      %1175 = vmatprep.subr.mxu0 0.0
      %1176 = vmatpush1.msra.mxu0 0.0
      %1177 = vmatprep.subr.mxu0 0.0
      %1178 = vmatpush1.msra.mxu0 0.0
      %1179 = vmatprep.subr.mxu0 0.0
      %1180 = vmatpush1.msra.mxu0 0.0
      %1181 = vmatprep.subr.mxu0 0.0
      %1182 = vmatpush1.msra.mxu0 0.0
      %1183 = vmatprep.subr.mxu0 0.0
      %1184 = vmatpush1.msra.mxu0 0.0
      %1185 = vmatprep.subr.mxu0 0.0
      %1186 = vmatpush1.msra.mxu0 0.0
      %1187 = vmatprep.subr.mxu0 0.0
      %1188 = vmatpush1.msra.mxu0 0.0
      %1189 = vmatprep.subr.mxu0 0.0
      %1190 = vmatpush1.msra.mxu0 0.0
      %1191 = vmatprep.mubr.f32.mxu0 0.0
      %1192 = vmatmul.mubr.f32.gmra.mrb[0].mxu0 %v1119
      %v1193 = vpop.f32.mrb[0].mxu0
      %v1194 = vadd.f32 0.0, %v1193
      %v1195 = vpop.f32.mrb[0].mxu0
      %v1196 = vadd.f32 0.0, %v1195
      %1197 = vdwg.mxu0
      %1198 = vmatprep.subr.mxu0 0.0
      %1199 = vmatpush1.msra.mxu0 %v1125
      %1200 = vmatprep.subr.mxu0 0.0
      %1201 = vmatpush1.msra.mxu0 0.0
      %1202 = vmatprep.subr.mxu0 0.0
      %1203 = vmatpush1.msra.mxu0 0.0
      %1204 = vmatprep.subr.mxu0 0.0
      %1205 = vmatpush1.msra.mxu0 0.0
      %1206 = vmatprep.subr.mxu0 0.0
      %1207 = vmatpush1.msra.mxu0 0.0
      %1208 = vmatprep.subr.mxu0 0.0
      %1209 = vmatpush1.msra.mxu0 0.0
      %1210 = vmatprep.subr.mxu0 0.0
      %1211 = vmatpush1.msra.mxu0 0.0
      %1212 = vmatprep.subr.mxu0 0.0
      %1213 = vmatpush1.msra.mxu0 0.0
      %1214 = vmatprep.subr.mxu0 0.0
      %1215 = vmatpush1.msra.mxu0 0.0
      %1216 = vmatprep.subr.mxu0 0.0
      %1217 = vmatpush1.msra.mxu0 0.0
      %1218 = vmatprep.subr.mxu0 0.0
      %1219 = vmatpush1.msra.mxu0 0.0
      %1220 = vmatprep.subr.mxu0 0.0
      %1221 = vmatpush1.msra.mxu0 0.0
      %1222 = vmatprep.subr.mxu0 0.0
      %1223 = vmatpush1.msra.mxu0 0.0
      %1224 = vmatprep.subr.mxu0 0.0
      %1225 = vmatpush1.msra.mxu0 0.0
      %1226 = vmatprep.subr.mxu0 0.0
      %1227 = vmatpush1.msra.mxu0 0.0
      %1228 = vmatprep.subr.mxu0 0.0
      %1229 = vmatpush1.msra.mxu0 0.0
      %1230 = vmatprep.subr.mxu0 0.0
      %1231 = vmatpush1.msra.mxu0 0.0
      %1232 = vmatprep.subr.mxu0 0.0
      %1233 = vmatpush1.msra.mxu0 0.0
      %1234 = vmatprep.subr.mxu0 0.0
      %1235 = vmatpush1.msra.mxu0 0.0
      %1236 = vmatprep.subr.mxu0 0.0
      %1237 = vmatpush1.msra.mxu0 0.0
      %1238 = vmatprep.subr.mxu0 0.0
      %1239 = vmatpush1.msra.mxu0 0.0
      %1240 = vmatprep.subr.mxu0 0.0
      %1241 = vmatpush1.msra.mxu0 0.0
      %1242 = vmatprep.subr.mxu0 0.0
      %1243 = vmatpush1.msra.mxu0 0.0
      %1244 = vmatprep.subr.mxu0 0.0
      %1245 = vmatpush1.msra.mxu0 0.0
      %1246 = vmatprep.subr.mxu0 0.0
      %1247 = vmatpush1.msra.mxu0 0.0
      %1248 = vmatprep.subr.mxu0 0.0
      %1249 = vmatpush1.msra.mxu0 0.0
      %1250 = vmatprep.subr.mxu0 0.0
      %1251 = vmatpush1.msra.mxu0 0.0
      %1252 = vmatprep.subr.mxu0 0.0
      %1253 = vmatpush1.msra.mxu0 0.0
      %1254 = vmatprep.subr.mxu0 0.0
      %1255 = vmatpush1.msra.mxu0 0.0
      %1256 = vmatprep.subr.mxu0 0.0
      %1257 = vmatpush1.msra.mxu0 0.0
      %1258 = vmatprep.subr.mxu0 0.0
      %1259 = vmatpush1.msra.mxu0 0.0
      %1260 = vmatprep.subr.mxu0 0.0
      %1261 = vmatpush1.msra.mxu0 0.0
      %1262 = vmatprep.mubr.f32.mxu0 0.0
      %1263 = vmatmul.mubr.f32.gmra.mrb[0].mxu0 %v1119
      %v1264 = vpop.f32.mrb[0].mxu0
      %v1265 = vadd.f32 0.0, %v1264
      %v1266 = vpop.f32.mrb[0].mxu0
      %1267 = vdwg.mxu0
      %v1268 = vadd.f32 %v1101, %v1194
      %v1269 = vadd.f32 %v1102, %v1196
      %v1270 = vadd.f32 %v1103, %v1265
      %s1271 = scalar_lea.vmem %s2, 48
      %v1272 = vld [vmem:[%s1271] sm:$0xff]
      %1273 = vrot.lane.b32.xlu0 %v279, 92
      %v1274 = vpop.permute.xlu0 %1273
      %1275 = vrot.lane.b32.xlu0 %v284, 92
      %v1276 = vpop.permute.xlu0 %1275
      %1277 = vrot.lane.b32.xlu0 %v280, 92
      %v1278 = vpop.permute.xlu0 %1277
      %1279 = vrot.lane.b32.xlu0 %v281, 92
      %v1280 = vpop.permute.xlu0 %1279
      %vm1281 = vcmask 752640
      %v1282 = vsel %vm1281, %v1274, %v1276
      %v1283 = vsel %vm1281, %v1276, %v1278
      %v1284 = vsel %vm1281, %v1278, %v1280
      %v1286 = vsel %vm301, %v1272, 0
      %v1288 = vsel %vm305, %v1282, 0
      %v1290 = vsel %vm305, %v1283, 0
      %v1292 = vsel %vm305, %v1284, 0
      %1294 = vmatprep.subr.mxu0 %v1290
      %1295 = vmatpush1.msra.mxu0 %v1288
      %1296 = vmatprep.subr.mxu0 0.0
      %1297 = vmatpush1.msra.mxu0 0.0
      %1298 = vmatprep.subr.mxu0 0.0
      %1299 = vmatpush1.msra.mxu0 0.0
      %1300 = vmatprep.subr.mxu0 0.0
      %1301 = vmatpush1.msra.mxu0 0.0
      %1302 = vmatprep.subr.mxu0 0.0
      %1303 = vmatpush1.msra.mxu0 0.0
      %1304 = vmatprep.subr.mxu0 0.0
      %1305 = vmatpush1.msra.mxu0 0.0
      %1306 = vmatprep.subr.mxu0 0.0
      %1307 = vmatpush1.msra.mxu0 0.0
      %1308 = vmatprep.subr.mxu0 0.0
      %1309 = vmatpush1.msra.mxu0 0.0
      %1310 = vmatprep.subr.mxu0 0.0
      %1311 = vmatpush1.msra.mxu0 0.0
      %1312 = vmatprep.subr.mxu0 0.0
      %1313 = vmatpush1.msra.mxu0 0.0
      %1314 = vmatprep.subr.mxu0 0.0
      %1315 = vmatpush1.msra.mxu0 0.0
      %1316 = vmatprep.subr.mxu0 0.0
      %1317 = vmatpush1.msra.mxu0 0.0
      %1318 = vmatprep.subr.mxu0 0.0
      %1319 = vmatpush1.msra.mxu0 0.0
      %1320 = vmatprep.subr.mxu0 0.0
      %1321 = vmatpush1.msra.mxu0 0.0
      %1322 = vmatprep.subr.mxu0 0.0
      %1323 = vmatpush1.msra.mxu0 0.0
      %1324 = vmatprep.subr.mxu0 0.0
      %1325 = vmatpush1.msra.mxu0 0.0
      %1326 = vmatprep.subr.mxu0 0.0
      %1327 = vmatpush1.msra.mxu0 0.0
      %1328 = vmatprep.subr.mxu0 0.0
      %1329 = vmatpush1.msra.mxu0 0.0
      %1330 = vmatprep.subr.mxu0 0.0
      %1331 = vmatpush1.msra.mxu0 0.0
      %1332 = vmatprep.subr.mxu0 0.0
      %1333 = vmatpush1.msra.mxu0 0.0
      %1334 = vmatprep.subr.mxu0 0.0
      %1335 = vmatpush1.msra.mxu0 0.0
      %1336 = vmatprep.subr.mxu0 0.0
      %1337 = vmatpush1.msra.mxu0 0.0
      %1338 = vmatprep.subr.mxu0 0.0
      %1339 = vmatpush1.msra.mxu0 0.0
      %1340 = vmatprep.subr.mxu0 0.0
      %1341 = vmatpush1.msra.mxu0 0.0
      %1342 = vmatprep.subr.mxu0 0.0
      %1343 = vmatpush1.msra.mxu0 0.0
      %1344 = vmatprep.subr.mxu0 0.0
      %1345 = vmatpush1.msra.mxu0 0.0
      %1346 = vmatprep.subr.mxu0 0.0
      %1347 = vmatpush1.msra.mxu0 0.0
      %1348 = vmatprep.subr.mxu0 0.0
      %1349 = vmatpush1.msra.mxu0 0.0
      %1350 = vmatprep.subr.mxu0 0.0
      %1351 = vmatpush1.msra.mxu0 0.0
      %1352 = vmatprep.subr.mxu0 0.0
      %1353 = vmatpush1.msra.mxu0 0.0
      %1354 = vmatprep.subr.mxu0 0.0
      %1355 = vmatpush1.msra.mxu0 0.0
      %1356 = vmatprep.subr.mxu0 0.0
      %1357 = vmatpush1.msra.mxu0 0.0
      %1358 = vmatprep.mubr.f32.mxu0 0.0
      %1359 = vmatmul.mubr.f32.gmra.mrb[0].mxu0 %v1286
      %v1360 = vpop.f32.mrb[0].mxu0
      %v1361 = vadd.f32 0.0, %v1360
      %v1362 = vpop.f32.mrb[0].mxu0
      %v1363 = vadd.f32 0.0, %v1362
      %1364 = vdwg.mxu0
      %1365 = vmatprep.subr.mxu0 0.0
      %1366 = vmatpush1.msra.mxu0 %v1292
      %1367 = vmatprep.subr.mxu0 0.0
      %1368 = vmatpush1.msra.mxu0 0.0
      %1369 = vmatprep.subr.mxu0 0.0
      %1370 = vmatpush1.msra.mxu0 0.0
      %1371 = vmatprep.subr.mxu0 0.0
      %1372 = vmatpush1.msra.mxu0 0.0
      %1373 = vmatprep.subr.mxu0 0.0
      %1374 = vmatpush1.msra.mxu0 0.0
      %1375 = vmatprep.subr.mxu0 0.0
      %1376 = vmatpush1.msra.mxu0 0.0
      %1377 = vmatprep.subr.mxu0 0.0
      %1378 = vmatpush1.msra.mxu0 0.0
      %1379 = vmatprep.subr.mxu0 0.0
      %1380 = vmatpush1.msra.mxu0 0.0
      %1381 = vmatprep.subr.mxu0 0.0
      %1382 = vmatpush1.msra.mxu0 0.0
      %1383 = vmatprep.subr.mxu0 0.0
      %1384 = vmatpush1.msra.mxu0 0.0
      %1385 = vmatprep.subr.mxu0 0.0
      %1386 = vmatpush1.msra.mxu0 0.0
      %1387 = vmatprep.subr.mxu0 0.0
      %1388 = vmatpush1.msra.mxu0 0.0
      %1389 = vmatprep.subr.mxu0 0.0
      %1390 = vmatpush1.msra.mxu0 0.0
      %1391 = vmatprep.subr.mxu0 0.0
      %1392 = vmatpush1.msra.mxu0 0.0
      %1393 = vmatprep.subr.mxu0 0.0
      %1394 = vmatpush1.msra.mxu0 0.0
      %1395 = vmatprep.subr.mxu0 0.0
      %1396 = vmatpush1.msra.mxu0 0.0
      %1397 = vmatprep.subr.mxu0 0.0
      %1398 = vmatpush1.msra.mxu0 0.0
      %1399 = vmatprep.subr.mxu0 0.0
      %1400 = vmatpush1.msra.mxu0 0.0
      %1401 = vmatprep.subr.mxu0 0.0
      %1402 = vmatpush1.msra.mxu0 0.0
      %1403 = vmatprep.subr.mxu0 0.0
      %1404 = vmatpush1.msra.mxu0 0.0
      %1405 = vmatprep.subr.mxu0 0.0
      %1406 = vmatpush1.msra.mxu0 0.0
      %1407 = vmatprep.subr.mxu0 0.0
      %1408 = vmatpush1.msra.mxu0 0.0
      %1409 = vmatprep.subr.mxu0 0.0
      %1410 = vmatpush1.msra.mxu0 0.0
      %1411 = vmatprep.subr.mxu0 0.0
      %1412 = vmatpush1.msra.mxu0 0.0
      %1413 = vmatprep.subr.mxu0 0.0
      %1414 = vmatpush1.msra.mxu0 0.0
      %1415 = vmatprep.subr.mxu0 0.0
      %1416 = vmatpush1.msra.mxu0 0.0
      %1417 = vmatprep.subr.mxu0 0.0
      %1418 = vmatpush1.msra.mxu0 0.0
      %1419 = vmatprep.subr.mxu0 0.0
      %1420 = vmatpush1.msra.mxu0 0.0
      %1421 = vmatprep.subr.mxu0 0.0
      %1422 = vmatpush1.msra.mxu0 0.0
      %1423 = vmatprep.subr.mxu0 0.0
      %1424 = vmatpush1.msra.mxu0 0.0
      %1425 = vmatprep.subr.mxu0 0.0
      %1426 = vmatpush1.msra.mxu0 0.0
      %1427 = vmatprep.subr.mxu0 0.0
      %1428 = vmatpush1.msra.mxu0 0.0
      %1429 = vmatprep.mubr.f32.mxu0 0.0
      %1430 = vmatmul.mubr.f32.gmra.mrb[0].mxu0 %v1286
      %v1431 = vpop.f32.mrb[0].mxu0
      %v1432 = vadd.f32 0.0, %v1431
      %v1433 = vpop.f32.mrb[0].mxu0
      %1434 = vdwg.mxu0
      %v1435 = vadd.f32 %v1268, %v1361
      %v1436 = vadd.f32 %v1269, %v1363
      %v1437 = vadd.f32 %v1270, %v1432
      %s1438 = scalar_lea.vmem %s2, 56
      %v1439 = vld [vmem:[%s1438] sm:$0xff]
      %1440 = vrot.lane.b32.xlu0 %v279, 91
      %v1441 = vpop.permute.xlu0 %1440
      %1442 = vrot.lane.b32.xlu0 %v284, 91
      %v1443 = vpop.permute.xlu0 %1442
      %1444 = vrot.lane.b32.xlu0 %v280, 91
      %v1445 = vpop.permute.xlu0 %1444
      %1446 = vrot.lane.b32.xlu0 %v281, 91
      %v1447 = vpop.permute.xlu0 %1446
      %vm1448 = vcmask 744448
      %v1449 = vsel %vm1448, %v1441, %v1443
      %v1450 = vsel %vm1448, %v1443, %v1445
      %v1451 = vsel %vm1448, %v1445, %v1447
      %v1453 = vsel %vm301, %v1439, 0
      %v1455 = vsel %vm305, %v1449, 0
      %v1457 = vsel %vm305, %v1450, 0
      %v1459 = vsel %vm305, %v1451, 0
      %1461 = vmatprep.subr.mxu0 %v1457
      %1462 = vmatpush1.msra.mxu0 %v1455
      %1463 = vmatprep.subr.mxu0 0.0
      %1464 = vmatpush1.msra.mxu0 0.0
      %1465 = vmatprep.subr.mxu0 0.0
      %1466 = vmatpush1.msra.mxu0 0.0
      %1467 = vmatprep.subr.mxu0 0.0
      %1468 = vmatpush1.msra.mxu0 0.0
      %1469 = vmatprep.subr.mxu0 0.0
      %1470 = vmatpush1.msra.mxu0 0.0
      %1471 = vmatprep.subr.mxu0 0.0
      %1472 = vmatpush1.msra.mxu0 0.0
      %1473 = vmatprep.subr.mxu0 0.0
      %1474 = vmatpush1.msra.mxu0 0.0
      %1475 = vmatprep.subr.mxu0 0.0
      %1476 = vmatpush1.msra.mxu0 0.0
      %1477 = vmatprep.subr.mxu0 0.0
      %1478 = vmatpush1.msra.mxu0 0.0
      %1479 = vmatprep.subr.mxu0 0.0
      %1480 = vmatpush1.msra.mxu0 0.0
      %1481 = vmatprep.subr.mxu0 0.0
      %1482 = vmatpush1.msra.mxu0 0.0
      %1483 = vmatprep.subr.mxu0 0.0
      %1484 = vmatpush1.msra.mxu0 0.0
      %1485 = vmatprep.subr.mxu0 0.0
      %1486 = vmatpush1.msra.mxu0 0.0
      %1487 = vmatprep.subr.mxu0 0.0
      %1488 = vmatpush1.msra.mxu0 0.0
      %1489 = vmatprep.subr.mxu0 0.0
      %1490 = vmatpush1.msra.mxu0 0.0
      %1491 = vmatprep.subr.mxu0 0.0
      %1492 = vmatpush1.msra.mxu0 0.0
      %1493 = vmatprep.subr.mxu0 0.0
      %1494 = vmatpush1.msra.mxu0 0.0
      %1495 = vmatprep.subr.mxu0 0.0
      %1496 = vmatpush1.msra.mxu0 0.0
      %1497 = vmatprep.subr.mxu0 0.0
      %1498 = vmatpush1.msra.mxu0 0.0
      %1499 = vmatprep.subr.mxu0 0.0
      %1500 = vmatpush1.msra.mxu0 0.0
      %1501 = vmatprep.subr.mxu0 0.0
      %1502 = vmatpush1.msra.mxu0 0.0
      %1503 = vmatprep.subr.mxu0 0.0
      %1504 = vmatpush1.msra.mxu0 0.0
      %1505 = vmatprep.subr.mxu0 0.0
      %1506 = vmatpush1.msra.mxu0 0.0
      %1507 = vmatprep.subr.mxu0 0.0
      %1508 = vmatpush1.msra.mxu0 0.0
      %1509 = vmatprep.subr.mxu0 0.0
      %1510 = vmatpush1.msra.mxu0 0.0
      %1511 = vmatprep.subr.mxu0 0.0
      %1512 = vmatpush1.msra.mxu0 0.0
      %1513 = vmatprep.subr.mxu0 0.0
      %1514 = vmatpush1.msra.mxu0 0.0
      %1515 = vmatprep.subr.mxu0 0.0
      %1516 = vmatpush1.msra.mxu0 0.0
      %1517 = vmatprep.subr.mxu0 0.0
      %1518 = vmatpush1.msra.mxu0 0.0
      %1519 = vmatprep.subr.mxu0 0.0
      %1520 = vmatpush1.msra.mxu0 0.0
      %1521 = vmatprep.subr.mxu0 0.0
      %1522 = vmatpush1.msra.mxu0 0.0
      %1523 = vmatprep.subr.mxu0 0.0
      %1524 = vmatpush1.msra.mxu0 0.0
      %1525 = vmatprep.mubr.f32.mxu0 0.0
      %1526 = vmatmul.mubr.f32.gmra.mrb[0].mxu0 %v1453
      %v1527 = vpop.f32.mrb[0].mxu0
      %v1528 = vadd.f32 0.0, %v1527
      %v1529 = vpop.f32.mrb[0].mxu0
      %v1530 = vadd.f32 0.0, %v1529
      %1531 = vdwg.mxu0
      %1532 = vmatprep.subr.mxu0 0.0
      %1533 = vmatpush1.msra.mxu0 %v1459
      %1534 = vmatprep.subr.mxu0 0.0
      %1535 = vmatpush1.msra.mxu0 0.0
      %1536 = vmatprep.subr.mxu0 0.0
      %1537 = vmatpush1.msra.mxu0 0.0
      %1538 = vmatprep.subr.mxu0 0.0
      %1539 = vmatpush1.msra.mxu0 0.0
      %1540 = vmatprep.subr.mxu0 0.0
      %1541 = vmatpush1.msra.mxu0 0.0
      %1542 = vmatprep.subr.mxu0 0.0
      %1543 = vmatpush1.msra.mxu0 0.0
      %1544 = vmatprep.subr.mxu0 0.0
      %1545 = vmatpush1.msra.mxu0 0.0
      %1546 = vmatprep.subr.mxu0 0.0
      %1547 = vmatpush1.msra.mxu0 0.0
      %1548 = vmatprep.subr.mxu0 0.0
      %1549 = vmatpush1.msra.mxu0 0.0
      %1550 = vmatprep.subr.mxu0 0.0
      %1551 = vmatpush1.msra.mxu0 0.0
      %1552 = vmatprep.subr.mxu0 0.0
      %1553 = vmatpush1.msra.mxu0 0.0
      %1554 = vmatprep.subr.mxu0 0.0
      %1555 = vmatpush1.msra.mxu0 0.0
      %1556 = vmatprep.subr.mxu0 0.0
      %1557 = vmatpush1.msra.mxu0 0.0
      %1558 = vmatprep.subr.mxu0 0.0
      %1559 = vmatpush1.msra.mxu0 0.0
      %1560 = vmatprep.subr.mxu0 0.0
      %1561 = vmatpush1.msra.mxu0 0.0
      %1562 = vmatprep.subr.mxu0 0.0
      %1563 = vmatpush1.msra.mxu0 0.0
      %1564 = vmatprep.subr.mxu0 0.0
      %1565 = vmatpush1.msra.mxu0 0.0
      %1566 = vmatprep.subr.mxu0 0.0
      %1567 = vmatpush1.msra.mxu0 0.0
      %1568 = vmatprep.subr.mxu0 0.0
      %1569 = vmatpush1.msra.mxu0 0.0
      %1570 = vmatprep.subr.mxu0 0.0
      %1571 = vmatpush1.msra.mxu0 0.0
      %1572 = vmatprep.subr.mxu0 0.0
      %1573 = vmatpush1.msra.mxu0 0.0
      %1574 = vmatprep.subr.mxu0 0.0
      %1575 = vmatpush1.msra.mxu0 0.0
      %1576 = vmatprep.subr.mxu0 0.0
      %1577 = vmatpush1.msra.mxu0 0.0
      %1578 = vmatprep.subr.mxu0 0.0
      %1579 = vmatpush1.msra.mxu0 0.0
      %1580 = vmatprep.subr.mxu0 0.0
      %1581 = vmatpush1.msra.mxu0 0.0
      %1582 = vmatprep.subr.mxu0 0.0
      %1583 = vmatpush1.msra.mxu0 0.0
      %1584 = vmatprep.subr.mxu0 0.0
      %1585 = vmatpush1.msra.mxu0 0.0
      %1586 = vmatprep.subr.mxu0 0.0
      %1587 = vmatpush1.msra.mxu0 0.0
      %1588 = vmatprep.subr.mxu0 0.0
      %1589 = vmatpush1.msra.mxu0 0.0
      %1590 = vmatprep.subr.mxu0 0.0
      %1591 = vmatpush1.msra.mxu0 0.0
      %1592 = vmatprep.subr.mxu0 0.0
      %1593 = vmatpush1.msra.mxu0 0.0
      %1594 = vmatprep.subr.mxu0 0.0
      %1595 = vmatpush1.msra.mxu0 0.0
      %1596 = vmatprep.mubr.f32.mxu0 0.0
      %1597 = vmatmul.mubr.f32.gmra.mrb[0].mxu0 %v1453
      %v1598 = vpop.f32.mrb[0].mxu0
      %v1599 = vadd.f32 0.0, %v1598
      %v1600 = vpop.f32.mrb[0].mxu0
      %1601 = vdwg.mxu0
      %v1602 = vadd.f32 %v1435, %v1528
      %v1603 = vadd.f32 %v1436, %v1530
      %v1604 = vadd.f32 %v1437, %v1599
      %s1605 = scalar_lea.vmem %s2, 64
      %v1606 = vld [vmem:[%s1605] sm:$0xff]
      %1607 = vrot.lane.b32.xlu0 %v279, 90
      %v1608 = vpop.permute.xlu0 %1607
      %1609 = vrot.lane.b32.xlu0 %v284, 90
      %v1610 = vpop.permute.xlu0 %1609
      %1611 = vrot.lane.b32.xlu0 %v280, 90
      %v1612 = vpop.permute.xlu0 %1611
      %1613 = vrot.lane.b32.xlu0 %v281, 90
      %v1614 = vpop.permute.xlu0 %1613
      %vm1615 = vcmask 736256
      %v1616 = vsel %vm1615, %v1608, %v1610
      %v1617 = vsel %vm1615, %v1610, %v1612
      %v1618 = vsel %vm1615, %v1612, %v1614
      %v1620 = vsel %vm301, %v1606, 0
      %v1622 = vsel %vm305, %v1616, 0
      %v1624 = vsel %vm305, %v1617, 0
      %v1626 = vsel %vm305, %v1618, 0
      %1628 = vmatprep.subr.mxu0 %v1624
      %1629 = vmatpush1.msra.mxu0 %v1622
      %1630 = vmatprep.subr.mxu0 0.0
      %1631 = vmatpush1.msra.mxu0 0.0
      %1632 = vmatprep.subr.mxu0 0.0
      %1633 = vmatpush1.msra.mxu0 0.0
      %1634 = vmatprep.subr.mxu0 0.0
      %1635 = vmatpush1.msra.mxu0 0.0
      %1636 = vmatprep.subr.mxu0 0.0
      %1637 = vmatpush1.msra.mxu0 0.0
      %1638 = vmatprep.subr.mxu0 0.0
      %1639 = vmatpush1.msra.mxu0 0.0
      %1640 = vmatprep.subr.mxu0 0.0
      %1641 = vmatpush1.msra.mxu0 0.0
      %1642 = vmatprep.subr.mxu0 0.0
      %1643 = vmatpush1.msra.mxu0 0.0
      %1644 = vmatprep.subr.mxu0 0.0
      %1645 = vmatpush1.msra.mxu0 0.0
      %1646 = vmatprep.subr.mxu0 0.0
      %1647 = vmatpush1.msra.mxu0 0.0
      %1648 = vmatprep.subr.mxu0 0.0
      %1649 = vmatpush1.msra.mxu0 0.0
      %1650 = vmatprep.subr.mxu0 0.0
      %1651 = vmatpush1.msra.mxu0 0.0
      %1652 = vmatprep.subr.mxu0 0.0
      %1653 = vmatpush1.msra.mxu0 0.0
      %1654 = vmatprep.subr.mxu0 0.0
      %1655 = vmatpush1.msra.mxu0 0.0
      %1656 = vmatprep.subr.mxu0 0.0
      %1657 = vmatpush1.msra.mxu0 0.0
      %1658 = vmatprep.subr.mxu0 0.0
      %1659 = vmatpush1.msra.mxu0 0.0
      %1660 = vmatprep.subr.mxu0 0.0
      %1661 = vmatpush1.msra.mxu0 0.0
      %1662 = vmatprep.subr.mxu0 0.0
      %1663 = vmatpush1.msra.mxu0 0.0
      %1664 = vmatprep.subr.mxu0 0.0
      %1665 = vmatpush1.msra.mxu0 0.0
      %1666 = vmatprep.subr.mxu0 0.0
      %1667 = vmatpush1.msra.mxu0 0.0
      %1668 = vmatprep.subr.mxu0 0.0
      %1669 = vmatpush1.msra.mxu0 0.0
      %1670 = vmatprep.subr.mxu0 0.0
      %1671 = vmatpush1.msra.mxu0 0.0
      %1672 = vmatprep.subr.mxu0 0.0
      %1673 = vmatpush1.msra.mxu0 0.0
      %1674 = vmatprep.subr.mxu0 0.0
      %1675 = vmatpush1.msra.mxu0 0.0
      %1676 = vmatprep.subr.mxu0 0.0
      %1677 = vmatpush1.msra.mxu0 0.0
      %1678 = vmatprep.subr.mxu0 0.0
      %1679 = vmatpush1.msra.mxu0 0.0
      %1680 = vmatprep.subr.mxu0 0.0
      %1681 = vmatpush1.msra.mxu0 0.0
      %1682 = vmatprep.subr.mxu0 0.0
      %1683 = vmatpush1.msra.mxu0 0.0
      %1684 = vmatprep.subr.mxu0 0.0
      %1685 = vmatpush1.msra.mxu0 0.0
      %1686 = vmatprep.subr.mxu0 0.0
      %1687 = vmatpush1.msra.mxu0 0.0
      %1688 = vmatprep.subr.mxu0 0.0
      %1689 = vmatpush1.msra.mxu0 0.0
      %1690 = vmatprep.subr.mxu0 0.0
      %1691 = vmatpush1.msra.mxu0 0.0
      %1692 = vmatprep.mubr.f32.mxu0 0.0
      %1693 = vmatmul.mubr.f32.gmra.mrb[0].mxu0 %v1620
      %v1694 = vpop.f32.mrb[0].mxu0
      %v1695 = vadd.f32 0.0, %v1694
      %v1696 = vpop.f32.mrb[0].mxu0
      %v1697 = vadd.f32 0.0, %v1696
      %1698 = vdwg.mxu0
      %1699 = vmatprep.subr.mxu0 0.0
      %1700 = vmatpush1.msra.mxu0 %v1626
      %1701 = vmatprep.subr.mxu0 0.0
      %1702 = vmatpush1.msra.mxu0 0.0
      %1703 = vmatprep.subr.mxu0 0.0
      %1704 = vmatpush1.msra.mxu0 0.0
      %1705 = vmatprep.subr.mxu0 0.0
      %1706 = vmatpush1.msra.mxu0 0.0
      %1707 = vmatprep.subr.mxu0 0.0
      %1708 = vmatpush1.msra.mxu0 0.0
      %1709 = vmatprep.subr.mxu0 0.0
      %1710 = vmatpush1.msra.mxu0 0.0
      %1711 = vmatprep.subr.mxu0 0.0
      %1712 = vmatpush1.msra.mxu0 0.0
      %1713 = vmatprep.subr.mxu0 0.0
      %1714 = vmatpush1.msra.mxu0 0.0
      %1715 = vmatprep.subr.mxu0 0.0
      %1716 = vmatpush1.msra.mxu0 0.0
      %1717 = vmatprep.subr.mxu0 0.0
      %1718 = vmatpush1.msra.mxu0 0.0
      %1719 = vmatprep.subr.mxu0 0.0
      %1720 = vmatpush1.msra.mxu0 0.0
      %1721 = vmatprep.subr.mxu0 0.0
      %1722 = vmatpush1.msra.mxu0 0.0
      %1723 = vmatprep.subr.mxu0 0.0
      %1724 = vmatpush1.msra.mxu0 0.0
      %1725 = vmatprep.subr.mxu0 0.0
      %1726 = vmatpush1.msra.mxu0 0.0
      %1727 = vmatprep.subr.mxu0 0.0
      %1728 = vmatpush1.msra.mxu0 0.0
      %1729 = vmatprep.subr.mxu0 0.0
      %1730 = vmatpush1.msra.mxu0 0.0
      %1731 = vmatprep.subr.mxu0 0.0
      %1732 = vmatpush1.msra.mxu0 0.0
      %1733 = vmatprep.subr.mxu0 0.0
      %1734 = vmatpush1.msra.mxu0 0.0
      %1735 = vmatprep.subr.mxu0 0.0
      %1736 = vmatpush1.msra.mxu0 0.0
      %1737 = vmatprep.subr.mxu0 0.0
      %1738 = vmatpush1.msra.mxu0 0.0
      %1739 = vmatprep.subr.mxu0 0.0
      %1740 = vmatpush1.msra.mxu0 0.0
      %1741 = vmatprep.subr.mxu0 0.0
      %1742 = vmatpush1.msra.mxu0 0.0
      %1743 = vmatprep.subr.mxu0 0.0
      %1744 = vmatpush1.msra.mxu0 0.0
      %1745 = vmatprep.subr.mxu0 0.0
      %1746 = vmatpush1.msra.mxu0 0.0
      %1747 = vmatprep.subr.mxu0 0.0
      %1748 = vmatpush1.msra.mxu0 0.0
      %1749 = vmatprep.subr.mxu0 0.0
      %1750 = vmatpush1.msra.mxu0 0.0
      %1751 = vmatprep.subr.mxu0 0.0
      %1752 = vmatpush1.msra.mxu0 0.0
      %1753 = vmatprep.subr.mxu0 0.0
      %1754 = vmatpush1.msra.mxu0 0.0
      %1755 = vmatprep.subr.mxu0 0.0
      %1756 = vmatpush1.msra.mxu0 0.0
      %1757 = vmatprep.subr.mxu0 0.0
      %1758 = vmatpush1.msra.mxu0 0.0
      %1759 = vmatprep.subr.mxu0 0.0
      %1760 = vmatpush1.msra.mxu0 0.0
      %1761 = vmatprep.subr.mxu0 0.0
      %1762 = vmatpush1.msra.mxu0 0.0
      %1763 = vmatprep.mubr.f32.mxu0 0.0
      %1764 = vmatmul.mubr.f32.gmra.mrb[0].mxu0 %v1620
      %v1765 = vpop.f32.mrb[0].mxu0
      %v1766 = vadd.f32 0.0, %v1765
      %v1767 = vpop.f32.mrb[0].mxu0
      %1768 = vdwg.mxu0
      %v1769 = vadd.f32 %v1602, %v1695
      %v1770 = vadd.f32 %v1603, %v1697
      %v1771 = vadd.f32 %v1604, %v1766
      %v1772 = vld [vmem:[%s3] sm:$0xff]
      %1774 = vset.pattern.permute.xlu0 0
      %1775 = vperm.xlu0 %1774, %v1772
      %v1776 = vpop.permute.xlu0 %1775
      %v1778 = vmul.f32 %v1776, %v1769
      %v1779 = vmul.f32 %v1776, %v1770
      %v1780 = vmul.f32 %v1776, %v1771
      %v1781 = vld [vmem:[%s4] sm:$0xff]
      %1783 = vset.pattern.permute.xlu0 0
      %1784 = vperm.xlu0 %1783, %v1781
      %v1785 = vpop.permute.xlu0 %1784
      %v1787 = vadd.f32 %v1778, %v1785
      %v1788 = vadd.f32 %v1779, %v1785
      %v1789 = vadd.f32 %v1780, %v1785
      %1790 = vst [vmem:[%s277] sm:$0xff] %v1787
      %1791 = vst [vmem:[%s277 + $0x8] sm:$0xff] %v1788
      %1792 = vst [vmem:[%s277 + $0x10] sm:$0xff] %v1789
      %s1793 = smul.u32 3, %s16
      %p1794 = scmp.lt.s32.totalorder %s1793, 5
      %s1795 = scalar_select %p1794, %s1793, 5
      %s1796 = smul.addr %s1795, 8
      %s1797 = scalar_lea.vmem %s5, %s1796
      // Predicated region
      $region41: #{norm_conv2d_forward.1} parent=39 // pred_check
        %p1798 = pneg %p153
      $region42: #{norm_conv2d_forward.1} parent=39 // pred_check_branch
        %1800 = sbr.rel (%p1798) target = $region44
      $region43: #{norm_conv2d_forward.1} parent=39 // pred_region
        %s1801 = smul.u32 3, %s16
      $region44: #{norm_conv2d_forward.1} parent=39 // pred_fallthru
        _
    $region40: #{norm_conv2d_forward.1} parent=5 // pred_fallthru
      _
    %p1802 = scmp.le.s32.totalorder 2, %s11
    // Predicated region
    $region45: #{norm_conv2d_forward.1} parent=5 // pred_check
      %p1803 = pneg %p1802
    $region46: #{norm_conv2d_forward.1} parent=5 // pred_check_branch
      %1805 = sbr.rel (%p1803) target = $region48
    $region47: #{norm_conv2d_forward.1} parent=5 // pred_region
      %s1806 = ssub.s32 %s11, 2
      // Predicated region
      $region49: #{norm_conv2d_forward.1} parent=47 // pred_check
        %p1807 = pneg %p159
      $region50: #{norm_conv2d_forward.1} parent=47 // pred_check_branch
        %1809 = sbr.rel (%p1807) target = $region52
      $region51: #{norm_conv2d_forward.1} parent=47 // pred_region
        %s1810 = smul.u32 3, %s17
        %p1811 = scmp.lt.s32.totalorder %s1810, 5
        %s1812 = scalar_select %p1811, %s1810, 5
        %s1813 = smul.addr %s1812, 8
        %s1814 = scalar_lea.vmem %s5, %s1813
      $region52: #{norm_conv2d_forward.1} parent=47 // pred_fallthru
        _
    $region48: #{norm_conv2d_forward.1} parent=5 // pred_fallthru
      _
  $region6: #{norm_conv2d_forward.1} parent=0 // loop_footer
    %s15 = sadd.s32 1, %s11
  $region7: #{norm_conv2d_forward.1} parent=0 // loop_footer_branch
    %10 = sbr.rel target = $region3
  $region8: #{norm_conv2d_forward.1} parent=0 // loop_exit
    _

</llo_original>
